<compile_context>
chip_gen: v5e
topology: v5e:2x2
jax: 0.10.0
libtpu: 0.0.40
codegen_flags: <defaults>
</compile_context>

<pallas_src>
import jax
import jax.numpy as jnp
from jax.experimental import pallas as pl
from jax.experimental.pallas import tpu as pltpu


def _round_up(x, m):
    return ((x + m - 1) // m) * m


# ----------------------------------------------------------------------------
# Fused kernel: backbone(3x3 conv + ReLU) -> heads(1x1 + ReLU) -> predictor(1x1)
# ----------------------------------------------------------------------------
def _pagenet_kernel(x_ref, w1_ref, b1_ref, w2_ref, b2_ref, w3_ref, b3_ref,
                    o_ref):
    """
    x_ref : (1, H+2, W+2, Cin)  f32   zero-padded NHWC activation tile
    w1_ref: (9, Cin, C)         bf16  3x3 conv weights, (dy, dx) major
    b1_ref: (1, C)              f32
    w2_ref: (C, DH_PAD)         bf16  concat(box|dis|cls|rom) head weights (zero-padded)
    b2_ref: (1, DH_PAD)         f32
    w3_ref: (DH_PAD, COUT_PAD)  bf16  predictor weights (zero-padded)
    b3_ref: (1, COUT_PAD)       f32
    o_ref : (H*W, COUT_PAD)     f32
    """
    _, hp2, wp2, cin = x_ref.shape
    h, w = hp2 - 2, wp2 - 2
    rows = h * w
    c = w1_ref.shape[-1]

    # --- backbone: 3x3 / pad=1 conv as 9 accumulated shifted matmuls --------
    # The activation tile is DMA'd from HBM once; the 9 shifted windows are
    # re-read from VMEM, so the 9x im2col expansion never touches HBM.
    feat = jnp.zeros((rows, c), jnp.float32)
    for dy in range(3):
        for dx in range(3):
            xs = x_ref[0, dy:dy + h, dx:dx + w, :]            # (h, w, cin) f32
            xs = xs.reshape(rows, cin).astype(jnp.bfloat16)   # bf16 MXU operand
            feat = feat + jnp.dot(xs, w1_ref[dy * 3 + dx],
                                  preferred_element_type=jnp.float32)
    feat = jnp.maximum(feat + b1_ref[...], 0.0)               # f32 bias + ReLU

    # --- srm_rom_feat: fused box/dis/cls/rom 1x1-conv heads + ReLU ----------
    # `heads` is exactly concat(box, dis, cls, rom); padded lanes stay 0.
    heads = jnp.dot(feat.astype(jnp.bfloat16), w2_ref[...],
                    preferred_element_type=jnp.float32)
    heads = jnp.maximum(heads + b2_ref[...], 0.0)

    # --- predictor: 1x1 conv (linear) on the concatenated head features -----
    out = jnp.dot(heads.astype(jnp.bfloat16), w3_ref[...],
                  preferred_element_type=jnp.float32) + b3_ref[...]
    o_ref[...] = out.astype(o_ref.dtype)                      # lane-dense store


def pagenet_pallas(x_pad, w1, b1, w2p, b2p, w3p, b3p):
    B, hp2, wp2, cin = x_pad.shape
    H, W = hp2 - 2, wp2 - 2
    rows = H * W
    C = w1.shape[-1]
    DH_PAD = w2p.shape[-1]
    COUT_PAD = w3p.shape[-1]

    return pl.pallas_call(
        _pagenet_kernel,
        out_shape=jax.ShapeDtypeStruct((B * rows, COUT_PAD), jnp.float32),
        grid=(B,),
        in_specs=[
            pl.BlockSpec((1, hp2, wp2, cin), lambda b: (b, 0, 0, 0)),  # activations
            pl.BlockSpec((9, cin, C), lambda b: (0, 0, 0)),            # resident W1
            pl.BlockSpec((1, C), lambda b: (0, 0)),
            pl.BlockSpec((C, DH_PAD), lambda b: (0, 0)),               # resident W2
            pl.BlockSpec((1, DH_PAD), lambda b: (0, 0)),
            pl.BlockSpec((DH_PAD, COUT_PAD), lambda b: (0, 0)),        # resident W3
            pl.BlockSpec((1, COUT_PAD), lambda b: (0, 0)),
        ],
        out_specs=pl.BlockSpec((rows, COUT_PAD), lambda b: (b, 0)),
        compiler_params=pltpu.CompilerParams(
            dimension_semantics=("parallel",),       # one batch image per TC on v7x
            vmem_limit_bytes=32 * 1024 * 1024,       # explicit budget (< v7x 64 MiB)
        ),
    )(x_pad, w1, b1, w2p, b2p, w3p, b3p)


# ----------------------------------------------------------------------------
# PageNet forward (Pallas) and pure-JAX f32 reference
# ----------------------------------------------------------------------------
def pagenet_forward(x_nchw, params):
    B, Cin, H, W = x_nchw.shape
    x = jnp.transpose(x_nchw, (0, 2, 3, 1))                         # NCHW -> NHWC
    x_pad = jnp.pad(x, ((0, 0), (1, 1), (1, 1), (0, 0)))            # (B, H+2, W+2, Cin)

    w_bb = params["w_backbone"]                                     # (3, 3, Cin, C)
    C = w_bb.shape[-1]
    w1 = w_bb.reshape(9, Cin, C).astype(jnp.bfloat16)
    b1 = params["b_backbone"]

    w2, b2 = params["w_heads"], params["b_heads"]                   # (C, Dh), (1, Dh)
    w3, b3 = params["w_pred"], params["b_pred"]                     # (Dh, Cout), (1, Cout)
    Dh, Cout = w3.shape

    # Zero-pad head / output channel dims to 128 for lane-dense vregs & stores.
    DH_PAD = _round_up(Dh, 128)
    COUT_PAD = _round_up(Cout, 128)
    w2p = jnp.zeros((C, DH_PAD), jnp.float32).at[:, :Dh].set(w2).astype(jnp.bfloat16)
    b2p = jnp.zeros((1, DH_PAD), jnp.float32).at[:, :Dh].set(b2)
    w3p = jnp.zeros((DH_PAD, COUT_PAD), jnp.float32).at[:Dh, :Cout].set(w3).astype(jnp.bfloat16)
    b3p = jnp.zeros((1, COUT_PAD), jnp.float32).at[:, :Cout].set(b3)

    out_flat = pagenet_pallas(x_pad, w1, b1, w2p, b2p, w3p, b3p)    # (B*H*W, COUT_PAD)
    out = out_flat.reshape(B, H, W, COUT_PAD)[..., :Cout]
    return jnp.transpose(out, (0, 3, 1, 2))                         # back to NCHW


def pagenet_reference(x_nchw, params):
    """Pure-JAX f32 reference (same math, no Pallas, no bf16)."""
    B, Cin, H, W = x_nchw.shape
    x = jnp.transpose(x_nchw, (0, 2, 3, 1))
    xp = jnp.pad(x, ((0, 0), (1, 1), (1, 1), (0, 0)))
    cols = jnp.concatenate(
        [xp[:, dy:dy + H, dx:dx + W, :] for dy in range(3) for dx in range(3)],
        axis=-1).reshape(B * H * W, 9 * Cin)
    C = params["w_backbone"].shape[-1]
    feat = jnp.maximum(cols @ params["w_backbone"].reshape(9 * Cin, C)
                       + params["b_backbone"], 0.0)
    heads = jnp.maximum(feat @ params["w_heads"] + params["b_heads"], 0.0)
    out = heads @ params["w_pred"] + params["b_pred"]
    Cout = out.shape[-1]
    return jnp.transpose(out.reshape(B, H, W, Cout), (0, 3, 1, 2))


# ----------------------------------------------------------------------------
# Deterministic parameter init (synthetic; shapes implied by the forward pass)
# ----------------------------------------------------------------------------
def init_params(key, cin, c_hidden, head_dims, c_out):
    d_total = sum(head_dims)                  # concat(box, dis, cls, rom)
    ks = jax.random.split(key, 6)
    s = 0.1
    return {
        "w_backbone": s * jax.random.normal(ks[0], (3, 3, cin, c_hidden), jnp.float32),
        "b_backbone": s * jax.random.normal(ks[1], (1, c_hidden), jnp.float32),
        "w_heads":    s * jax.random.normal(ks[2], (c_hidden, d_total), jnp.float32),
        "b_heads":    s * jax.random.normal(ks[3], (1, d_total), jnp.float32),
        "w_pred":     s * jax.random.normal(ks[4], (d_total, c_out), jnp.float32),
        "b_pred":     s * jax.random.normal(ks[5], (1, c_out), jnp.float32),
    }


if __name__ == "__main__":
    B, Cin, H, W = 2, 4, 16, 16       # input: (2, 4, 16, 16) NCHW
    C_HIDDEN = 32                     # backbone feature channels
    HEAD_DIMS = (4, 2, 8, C_HIDDEN)   # box / dis / cls / rom feature widths
    C_OUT = 10                        # predictor output channels

    key = jax.random.PRNGKey(0)
    k_x, k_p = jax.random.split(key)
    x = jax.random.normal(k_x, (B, Cin, H, W), jnp.float32)
    params = init_params(k_p, Cin, C_HIDDEN, HEAD_DIMS, C_OUT)

    out = jax.jit(pagenet_forward)(x, params)
    jax.block_until_ready(out)
    assert out.shape == (B, C_OUT, H, W), out.shape

    # bf16-MXU / f32-accumulate kernel vs pure-f32 reference (loose tolerance).
    ref = pagenet_reference(x, params)
    max_err = float(jnp.max(jnp.abs(out - ref)))
    assert max_err < 7e-2, f"max abs err {max_err}"

    print("KERNEL_OK")
</pallas_src>

<mosaic_0001>
module attributes {stable_mosaic.version = 11 : i64} {
  func.func @_pagenet_kernel(%arg0: i32, %arg1: memref<1x18x18x4xf32, #tpu.memory_space<vmem>>, %arg2: memref<9x4x32xbf16, #tpu.memory_space<vmem>>, %arg3: memref<1x32xf32, #tpu.memory_space<vmem>>, %arg4: memref<32x128xbf16, #tpu.memory_space<vmem>>, %arg5: memref<1x128xf32, #tpu.memory_space<vmem>>, %arg6: memref<128x128xbf16, #tpu.memory_space<vmem>>, %arg7: memref<1x128xf32, #tpu.memory_space<vmem>>, %arg8: memref<256x128xf32, #tpu.memory_space<vmem>>) attributes {dimension_semantics = [#tpu.dimension_semantics<parallel>], iteration_bounds = array<i64: 2>, scalar_prefetch = 0 : i64, scratch_operands = 0 : i64, tpu.core_type = #tpu.core_type<tc>, window_params = [{transform_indices = @transform_0, window_bounds = array<i64: 1, 18, 18, 4>}, {pipeline_mode = #tpu.pipeline_mode<synchronous>, transform_indices = @transform_1, window_bounds = array<i64: 9, 4, 32>}, {pipeline_mode = #tpu.pipeline_mode<synchronous>, transform_indices = @transform_2, window_bounds = array<i64: 1, 32>}, {pipeline_mode = #tpu.pipeline_mode<synchronous>, transform_indices = @transform_3, window_bounds = array<i64: 32, 128>}, {pipeline_mode = #tpu.pipeline_mode<synchronous>, transform_indices = @transform_4, window_bounds = array<i64: 1, 128>}, {pipeline_mode = #tpu.pipeline_mode<synchronous>, transform_indices = @transform_5, window_bounds = array<i64: 128, 128>}, {pipeline_mode = #tpu.pipeline_mode<synchronous>, transform_indices = @transform_6, window_bounds = array<i64: 1, 128>}, {transform_indices = @transform_7, window_bounds = array<i64: 256, 128>}]} {
    %cst = arith.constant 0.000000e+00 : f32
    %0 = vector.broadcast %cst : f32 to vector<256x32xf32>
    %c0 = arith.constant 0 : index
    %c0_0 = arith.constant 0 : index
    %c0_1 = arith.constant 0 : index
    %c0_2 = arith.constant 0 : index
    %1 = vector.load %arg1[%c0, %c0_0, %c0_1, %c0_2] : memref<1x18x18x4xf32, #tpu.memory_space<vmem>>, vector<1x16x16x4xf32>
    %2 = vector.shape_cast %1 : vector<1x16x16x4xf32> to vector<16x16x4xf32>
    %3 = vector.shape_cast %2 : vector<16x16x4xf32> to vector<256x4xf32>
    %4 = arith.truncf %3 : vector<256x4xf32> to vector<256x4xbf16>
    %c0_3 = arith.constant 0 : index
    %c0_4 = arith.constant 0 : index
    %c0_5 = arith.constant 0 : index
    %5 = vector.load %arg2[%c0_3, %c0_4, %c0_5] : memref<9x4x32xbf16, #tpu.memory_space<vmem>>, vector<1x4x32xbf16>
    %6 = vector.shape_cast %5 : vector<1x4x32xbf16> to vector<4x32xbf16>
    %cst_6 = arith.constant dense<0.000000e+00> : vector<256x32xf32>
    %7 = tpu.matmul %4, %6, %cst_6 {dimension_numbers = #tpu.dot_dimension_numbers<[1], [0], [0], [1], [0, 0, 1, 1], [], []>} : vector<256x4xbf16>, vector<4x32xbf16>, vector<256x32xf32> -> vector<256x32xf32>
    %8 = arith.addf %0, %7 : vector<256x32xf32>
    %c0_7 = arith.constant 0 : index
    %c0_8 = arith.constant 0 : index
    %c1 = arith.constant 1 : index
    %c0_9 = arith.constant 0 : index
    %9 = vector.load %arg1[%c0_7, %c0_8, %c1, %c0_9] : memref<1x18x18x4xf32, #tpu.memory_space<vmem>>, vector<1x16x16x4xf32>
    %10 = vector.shape_cast %9 : vector<1x16x16x4xf32> to vector<16x16x4xf32>
    %11 = vector.shape_cast %10 : vector<16x16x4xf32> to vector<256x4xf32>
    %12 = arith.truncf %11 : vector<256x4xf32> to vector<256x4xbf16>
    %c1_10 = arith.constant 1 : index
    %c0_11 = arith.constant 0 : index
    %c0_12 = arith.constant 0 : index
    %13 = vector.load %arg2[%c1_10, %c0_11, %c0_12] : memref<9x4x32xbf16, #tpu.memory_space<vmem>>, vector<1x4x32xbf16>
    %14 = vector.shape_cast %13 : vector<1x4x32xbf16> to vector<4x32xbf16>
    %cst_13 = arith.constant dense<0.000000e+00> : vector<256x32xf32>
    %15 = tpu.matmul %12, %14, %cst_13 {dimension_numbers = #tpu.dot_dimension_numbers<[1], [0], [0], [1], [0, 0, 1, 1], [], []>} : vector<256x4xbf16>, vector<4x32xbf16>, vector<256x32xf32> -> vector<256x32xf32>
    %16 = arith.addf %8, %15 : vector<256x32xf32>
    %c0_14 = arith.constant 0 : index
    %c0_15 = arith.constant 0 : index
    %c2 = arith.constant 2 : index
    %c0_16 = arith.constant 0 : index
    %17 = vector.load %arg1[%c0_14, %c0_15, %c2, %c0_16] : memref<1x18x18x4xf32, #tpu.memory_space<vmem>>, vector<1x16x16x4xf32>
    %18 = vector.shape_cast %17 : vector<1x16x16x4xf32> to vector<16x16x4xf32>
    %19 = vector.shape_cast %18 : vector<16x16x4xf32> to vector<256x4xf32>
    %20 = arith.truncf %19 : vector<256x4xf32> to vector<256x4xbf16>
    %c2_17 = arith.constant 2 : index
    %c0_18 = arith.constant 0 : index
    %c0_19 = arith.constant 0 : index
    %21 = vector.load %arg2[%c2_17, %c0_18, %c0_19] : memref<9x4x32xbf16, #tpu.memory_space<vmem>>, vector<1x4x32xbf16>
    %22 = vector.shape_cast %21 : vector<1x4x32xbf16> to vector<4x32xbf16>
    %cst_20 = arith.constant dense<0.000000e+00> : vector<256x32xf32>
    %23 = tpu.matmul %20, %22, %cst_20 {dimension_numbers = #tpu.dot_dimension_numbers<[1], [0], [0], [1], [0, 0, 1, 1], [], []>} : vector<256x4xbf16>, vector<4x32xbf16>, vector<256x32xf32> -> vector<256x32xf32>
    %24 = arith.addf %16, %23 : vector<256x32xf32>
    %c0_21 = arith.constant 0 : index
    %c1_22 = arith.constant 1 : index
    %c0_23 = arith.constant 0 : index
    %c0_24 = arith.constant 0 : index
    %25 = vector.load %arg1[%c0_21, %c1_22, %c0_23, %c0_24] : memref<1x18x18x4xf32, #tpu.memory_space<vmem>>, vector<1x16x16x4xf32>
    %26 = vector.shape_cast %25 : vector<1x16x16x4xf32> to vector<16x16x4xf32>
    %27 = vector.shape_cast %26 : vector<16x16x4xf32> to vector<256x4xf32>
    %28 = arith.truncf %27 : vector<256x4xf32> to vector<256x4xbf16>
    %c3 = arith.constant 3 : index
    %c0_25 = arith.constant 0 : index
    %c0_26 = arith.constant 0 : index
    %29 = vector.load %arg2[%c3, %c0_25, %c0_26] : memref<9x4x32xbf16, #tpu.memory_space<vmem>>, vector<1x4x32xbf16>
    %30 = vector.shape_cast %29 : vector<1x4x32xbf16> to vector<4x32xbf16>
    %cst_27 = arith.constant dense<0.000000e+00> : vector<256x32xf32>
    %31 = tpu.matmul %28, %30, %cst_27 {dimension_numbers = #tpu.dot_dimension_numbers<[1], [0], [0], [1], [0, 0, 1, 1], [], []>} : vector<256x4xbf16>, vector<4x32xbf16>, vector<256x32xf32> -> vector<256x32xf32>
    %32 = arith.addf %24, %31 : vector<256x32xf32>
    %c0_28 = arith.constant 0 : index
    %c1_29 = arith.constant 1 : index
    %c1_30 = arith.constant 1 : index
    %c0_31 = arith.constant 0 : index
    %33 = vector.load %arg1[%c0_28, %c1_29, %c1_30, %c0_31] : memref<1x18x18x4xf32, #tpu.memory_space<vmem>>, vector<1x16x16x4xf32>
    %34 = vector.shape_cast %33 : vector<1x16x16x4xf32> to vector<16x16x4xf32>
    %35 = vector.shape_cast %34 : vector<16x16x4xf32> to vector<256x4xf32>
    %36 = arith.truncf %35 : vector<256x4xf32> to vector<256x4xbf16>
    %c4 = arith.constant 4 : index
    %c0_32 = arith.constant 0 : index
    %c0_33 = arith.constant 0 : index
    %37 = vector.load %arg2[%c4, %c0_32, %c0_33] : memref<9x4x32xbf16, #tpu.memory_space<vmem>>, vector<1x4x32xbf16>
    %38 = vector.shape_cast %37 : vector<1x4x32xbf16> to vector<4x32xbf16>
    %cst_34 = arith.constant dense<0.000000e+00> : vector<256x32xf32>
    %39 = tpu.matmul %36, %38, %cst_34 {dimension_numbers = #tpu.dot_dimension_numbers<[1], [0], [0], [1], [0, 0, 1, 1], [], []>} : vector<256x4xbf16>, vector<4x32xbf16>, vector<256x32xf32> -> vector<256x32xf32>
    %40 = arith.addf %32, %39 : vector<256x32xf32>
    %c0_35 = arith.constant 0 : index
    %c1_36 = arith.constant 1 : index
    %c2_37 = arith.constant 2 : index
    %c0_38 = arith.constant 0 : index
    %41 = vector.load %arg1[%c0_35, %c1_36, %c2_37, %c0_38] : memref<1x18x18x4xf32, #tpu.memory_space<vmem>>, vector<1x16x16x4xf32>
    %42 = vector.shape_cast %41 : vector<1x16x16x4xf32> to vector<16x16x4xf32>
    %43 = vector.shape_cast %42 : vector<16x16x4xf32> to vector<256x4xf32>
    %44 = arith.truncf %43 : vector<256x4xf32> to vector<256x4xbf16>
    %c5 = arith.constant 5 : index
    %c0_39 = arith.constant 0 : index
    %c0_40 = arith.constant 0 : index
    %45 = vector.load %arg2[%c5, %c0_39, %c0_40] : memref<9x4x32xbf16, #tpu.memory_space<vmem>>, vector<1x4x32xbf16>
    %46 = vector.shape_cast %45 : vector<1x4x32xbf16> to vector<4x32xbf16>
    %cst_41 = arith.constant dense<0.000000e+00> : vector<256x32xf32>
    %47 = tpu.matmul %44, %46, %cst_41 {dimension_numbers = #tpu.dot_dimension_numbers<[1], [0], [0], [1], [0, 0, 1, 1], [], []>} : vector<256x4xbf16>, vector<4x32xbf16>, vector<256x32xf32> -> vector<256x32xf32>
    %48 = arith.addf %40, %47 : vector<256x32xf32>
    %c0_42 = arith.constant 0 : index
    %c2_43 = arith.constant 2 : index
    %c0_44 = arith.constant 0 : index
    %c0_45 = arith.constant 0 : index
    %49 = vector.load %arg1[%c0_42, %c2_43, %c0_44, %c0_45] : memref<1x18x18x4xf32, #tpu.memory_space<vmem>>, vector<1x16x16x4xf32>
    %50 = vector.shape_cast %49 : vector<1x16x16x4xf32> to vector<16x16x4xf32>
    %51 = vector.shape_cast %50 : vector<16x16x4xf32> to vector<256x4xf32>
    %52 = arith.truncf %51 : vector<256x4xf32> to vector<256x4xbf16>
    %c6 = arith.constant 6 : index
    %c0_46 = arith.constant 0 : index
    %c0_47 = arith.constant 0 : index
    %53 = vector.load %arg2[%c6, %c0_46, %c0_47] : memref<9x4x32xbf16, #tpu.memory_space<vmem>>, vector<1x4x32xbf16>
    %54 = vector.shape_cast %53 : vector<1x4x32xbf16> to vector<4x32xbf16>
    %cst_48 = arith.constant dense<0.000000e+00> : vector<256x32xf32>
    %55 = tpu.matmul %52, %54, %cst_48 {dimension_numbers = #tpu.dot_dimension_numbers<[1], [0], [0], [1], [0, 0, 1, 1], [], []>} : vector<256x4xbf16>, vector<4x32xbf16>, vector<256x32xf32> -> vector<256x32xf32>
    %56 = arith.addf %48, %55 : vector<256x32xf32>
    %c0_49 = arith.constant 0 : index
    %c2_50 = arith.constant 2 : index
    %c1_51 = arith.constant 1 : index
    %c0_52 = arith.constant 0 : index
    %57 = vector.load %arg1[%c0_49, %c2_50, %c1_51, %c0_52] : memref<1x18x18x4xf32, #tpu.memory_space<vmem>>, vector<1x16x16x4xf32>
    %58 = vector.shape_cast %57 : vector<1x16x16x4xf32> to vector<16x16x4xf32>
    %59 = vector.shape_cast %58 : vector<16x16x4xf32> to vector<256x4xf32>
    %60 = arith.truncf %59 : vector<256x4xf32> to vector<256x4xbf16>
    %c7 = arith.constant 7 : index
    %c0_53 = arith.constant 0 : index
    %c0_54 = arith.constant 0 : index
    %61 = vector.load %arg2[%c7, %c0_53, %c0_54] : memref<9x4x32xbf16, #tpu.memory_space<vmem>>, vector<1x4x32xbf16>
    %62 = vector.shape_cast %61 : vector<1x4x32xbf16> to vector<4x32xbf16>
    %cst_55 = arith.constant dense<0.000000e+00> : vector<256x32xf32>
    %63 = tpu.matmul %60, %62, %cst_55 {dimension_numbers = #tpu.dot_dimension_numbers<[1], [0], [0], [1], [0, 0, 1, 1], [], []>} : vector<256x4xbf16>, vector<4x32xbf16>, vector<256x32xf32> -> vector<256x32xf32>
    %64 = arith.addf %56, %63 : vector<256x32xf32>
    %c0_56 = arith.constant 0 : index
    %c2_57 = arith.constant 2 : index
    %c2_58 = arith.constant 2 : index
    %c0_59 = arith.constant 0 : index
    %65 = vector.load %arg1[%c0_56, %c2_57, %c2_58, %c0_59] : memref<1x18x18x4xf32, #tpu.memory_space<vmem>>, vector<1x16x16x4xf32>
    %66 = vector.shape_cast %65 : vector<1x16x16x4xf32> to vector<16x16x4xf32>
    %67 = vector.shape_cast %66 : vector<16x16x4xf32> to vector<256x4xf32>
    %68 = arith.truncf %67 : vector<256x4xf32> to vector<256x4xbf16>
    %c8 = arith.constant 8 : index
    %c0_60 = arith.constant 0 : index
    %c0_61 = arith.constant 0 : index
    %69 = vector.load %arg2[%c8, %c0_60, %c0_61] : memref<9x4x32xbf16, #tpu.memory_space<vmem>>, vector<1x4x32xbf16>
    %70 = vector.shape_cast %69 : vector<1x4x32xbf16> to vector<4x32xbf16>
    %cst_62 = arith.constant dense<0.000000e+00> : vector<256x32xf32>
    %71 = tpu.matmul %68, %70, %cst_62 {dimension_numbers = #tpu.dot_dimension_numbers<[1], [0], [0], [1], [0, 0, 1, 1], [], []>} : vector<256x4xbf16>, vector<4x32xbf16>, vector<256x32xf32> -> vector<256x32xf32>
    %72 = arith.addf %64, %71 : vector<256x32xf32>
    %c0_63 = arith.constant 0 : index
    %c0_64 = arith.constant 0 : index
    %73 = vector.load %arg3[%c0_63, %c0_64] : memref<1x32xf32, #tpu.memory_space<vmem>>, vector<1x32xf32>
    %74 = vector.broadcast %73 : vector<1x32xf32> to vector<256x32xf32>
    %75 = arith.addf %72, %74 : vector<256x32xf32>
    %cst_65 = arith.constant 0.000000e+00 : f32
    %76 = vector.broadcast %cst_65 : f32 to vector<256x32xf32>
    %77 = arith.maximumf %75, %76 : vector<256x32xf32>
    %78 = arith.truncf %77 : vector<256x32xf32> to vector<256x32xbf16>
    %c0_66 = arith.constant 0 : index
    %c0_67 = arith.constant 0 : index
    %79 = vector.load %arg4[%c0_66, %c0_67] : memref<32x128xbf16, #tpu.memory_space<vmem>>, vector<32x128xbf16>
    %cst_68 = arith.constant dense<0.000000e+00> : vector<256x128xf32>
    %80 = tpu.matmul %78, %79, %cst_68 {dimension_numbers = #tpu.dot_dimension_numbers<[1], [0], [0], [1], [0, 0, 1, 1], [], []>} : vector<256x32xbf16>, vector<32x128xbf16>, vector<256x128xf32> -> vector<256x128xf32>
    %c0_69 = arith.constant 0 : index
    %c0_70 = arith.constant 0 : index
    %81 = vector.load %arg5[%c0_69, %c0_70] : memref<1x128xf32, #tpu.memory_space<vmem>>, vector<1x128xf32>
    %82 = vector.broadcast %81 : vector<1x128xf32> to vector<256x128xf32>
    %83 = arith.addf %80, %82 : vector<256x128xf32>
    %cst_71 = arith.constant 0.000000e+00 : f32
    %84 = vector.broadcast %cst_71 : f32 to vector<256x128xf32>
    %85 = arith.maximumf %83, %84 : vector<256x128xf32>
    %86 = arith.truncf %85 : vector<256x128xf32> to vector<256x128xbf16>
    %c0_72 = arith.constant 0 : index
    %c0_73 = arith.constant 0 : index
    %87 = vector.load %arg6[%c0_72, %c0_73] : memref<128x128xbf16, #tpu.memory_space<vmem>>, vector<128x128xbf16>
    %cst_74 = arith.constant dense<0.000000e+00> : vector<256x128xf32>
    %88 = tpu.matmul %86, %87, %cst_74 {dimension_numbers = #tpu.dot_dimension_numbers<[1], [0], [0], [1], [0, 0, 1, 1], [], []>} : vector<256x128xbf16>, vector<128x128xbf16>, vector<256x128xf32> -> vector<256x128xf32>
    %c0_75 = arith.constant 0 : index
    %c0_76 = arith.constant 0 : index
    %89 = vector.load %arg7[%c0_75, %c0_76] : memref<1x128xf32, #tpu.memory_space<vmem>>, vector<1x128xf32>
    %90 = vector.broadcast %89 : vector<1x128xf32> to vector<256x128xf32>
    %91 = arith.addf %88, %90 : vector<256x128xf32>
    %c0_77 = arith.constant 0 : index
    %c0_78 = arith.constant 0 : index
    %92 = vector.load %arg8[%c0_77, %c0_78] : memref<256x128xf32, #tpu.memory_space<vmem>>, vector<256x128xf32>
    tpu.vector_store %arg8[%c0_77, %c0_78], %91 {strides = array<i32>} : memref<256x128xf32, #tpu.memory_space<vmem>>, vector<256x128xf32>,
    return
  }
  func.func @transform_0(%arg0: i32) -> (i32, i32, i32, i32) {
    %c0_i32 = arith.constant 0 : i32
    %c0_i32_0 = arith.constant 0 : i32
    %c0_i32_1 = arith.constant 0 : i32
    %c0_i32_2 = arith.constant 0 : i32
    return %arg0, %c0_i32, %c0_i32_0, %c0_i32_1 : i32, i32, i32, i32
  }
  func.func @transform_1(%arg0: i32) -> (i32, i32, i32) {
    %c0_i32 = arith.constant 0 : i32
    %c0_i32_0 = arith.constant 0 : i32
    %c0_i32_1 = arith.constant 0 : i32
    %c0_i32_2 = arith.constant 0 : i32
    return %c0_i32, %c0_i32_0, %c0_i32_1 : i32, i32, i32
  }
  func.func @transform_2(%arg0: i32) -> (i32, i32) {
    %c0_i32 = arith.constant 0 : i32
    %c0_i32_0 = arith.constant 0 : i32
    %c0_i32_1 = arith.constant 0 : i32
    return %c0_i32, %c0_i32_0 : i32, i32
  }
  func.func @transform_3(%arg0: i32) -> (i32, i32) {
    %c0_i32 = arith.constant 0 : i32
    %c0_i32_0 = arith.constant 0 : i32
    %c0_i32_1 = arith.constant 0 : i32
    return %c0_i32, %c0_i32_0 : i32, i32
  }
  func.func @transform_4(%arg0: i32) -> (i32, i32) {
    %c0_i32 = arith.constant 0 : i32
    %c0_i32_0 = arith.constant 0 : i32
    %c0_i32_1 = arith.constant 0 : i32
    return %c0_i32, %c0_i32_0 : i32, i32
  }
  func.func @transform_5(%arg0: i32) -> (i32, i32) {
    %c0_i32 = arith.constant 0 : i32
    %c0_i32_0 = arith.constant 0 : i32
    %c0_i32_1 = arith.constant 0 : i32
    return %c0_i32, %c0_i32_0 : i32, i32
  }
  func.func @transform_6(%arg0: i32) -> (i32, i32) {
    %c0_i32 = arith.constant 0 : i32
    %c0_i32_0 = arith.constant 0 : i32
    %c0_i32_1 = arith.constant 0 : i32
    return %c0_i32, %c0_i32_0 : i32, i32
  }
  func.func @transform_7(%arg0: i32) -> (i32, i32) {
    %c0_i32 = arith.constant 0 : i32
    %c0_i32_0 = arith.constant 0 : i32
    return %arg0, %c0_i32 : i32, i32
  }
}

</mosaic_0001>

<llo_original>
// kernel: pagenet_forward.1
$region0: #{pagenet_forward.1}
  #allocation0 [shape = 'u32[]', space=smem, size = 0x4, offset = 0x4, fixed_abs, tag = 'smem constant byte address 0x4 - core index']
  #allocation1 [shape = 'u32[72,128]{1,0:T(1,128)}', space=vmem, size = 0x9000, scoped, tag = 'internal scratch']
  %s0 = inlined_call_operand.vmem [shape: f32[2,18,18,4], index: 0, kind: input, shape index: {}]
  %s1 = inlined_call_operand.vmem [shape: bf16[9,4,32], index: 1, kind: input, shape index: {}]
  %s2 = inlined_call_operand.vmem [shape: f32[1,32], index: 2, kind: input, shape index: {}]
  %s3 = inlined_call_operand.vmem [shape: bf16[32,128], index: 3, kind: input, shape index: {}]
  %s4 = inlined_call_operand.vmem [shape: f32[1,128], index: 4, kind: input, shape index: {}]
  %s5 = inlined_call_operand.vmem [shape: bf16[128,128], index: 5, kind: input, shape index: {}]
  %s6 = inlined_call_operand.vmem [shape: f32[1,128], index: 6, kind: input, shape index: {}]
  %s7 = inlined_call_operand.vmem [shape: f32[512,128], index: 7, kind: output, shape index: {}]
  %s8 = sld [smem:[#allocation0]]
  $region61: #{pagenet_forward.1} parent=0
    _
  %s10 = ssub.s32 1, %s8
  %s11 = scalar_select 0, %s10, %s8
  loop: start=0, step=1, limit=4
  $region2: #{pagenet_forward.1} parent=0 // loop_pre_header
    _
  $region3: #{pagenet_forward.1} parent=0 // loop_header
    %s13 = sphi 0, %s17
    %p14 = scmp.ge.s32.totalorder %s13, 4
    %s23 = sphi 0, %s25
    %s26 = sphi 0, %s23
    %s27 = sphi 0, %s26
    %s43 = sphi 0, %s27
    %s47 = sphi 0, %s47
    %s49 = sphi 0, %s47
    %s50 = sphi 0, %s49
    %s64 = sphi 0, %s50
    %s68 = sphi 0, %s68
    %s70 = sphi 0, %s68
    %s71 = sphi 0, %s70
    %s85 = sphi 0, %s71
    %s89 = sphi 0, %s89
    %s91 = sphi 0, %s89
    %s92 = sphi 0, %s91
    %s106 = sphi 0, %s92
    %s110 = sphi 0, %s110
    %s112 = sphi 0, %s110
    %s113 = sphi 0, %s112
    %s127 = sphi 0, %s113
    %s131 = sphi 0, %s131
    %s133 = sphi 0, %s131
    %s134 = sphi 0, %s133
    %s148 = sphi 0, %s134
    %s152 = sphi 0, %s152
    %s154 = sphi 0, %s152
    %s155 = sphi 0, %s154
    %s169 = sphi 0, %s155
    %s175 = sphi 0, %s177
    %s178 = sphi 0, %s175
    %s179 = sphi 0, %s178
    %s195 = sphi 0, %s179
  $region4: #{pagenet_forward.1} parent=0 // loop_header_branch
    %16 = sbr.rel (%p14) target = $region8
  $region5: #{pagenet_forward.1} parent=0 // loop_body
    %s18 = ssub.s32 %s13, 1
    %s19 = ssub.s32 %s13, 2
    %s20 = sadd.s32 %s13, 1
    %s21 = ssub.s32 %s13, %s20
    %p22 = scmp.eq.s32.totalorder %s21, 0
    %s24 = sadd.s32 %s23, 1
    %s25 = scalar_select %p22, %s23, %s24
    %p28 = pneg %p22
    %p29 = scmp.eq.s32.totalorder %s13, 1
    %p30 = por %p28, %p29
    %p31 = scmp.ne.s32.totalorder %s23, %s26
    %p32 = scmp.eq.s32.totalorder %s13, 0
    %p33 = por %p31, %p32
    %p34 = scmp.ne.s32.totalorder %s23, %s26
    %p35 = scmp.eq.s32.totalorder %s18, 1
    %p36 = por %p34, %p35
    %p37 = scmp.ne.s32.totalorder %s26, %s27
    %p38 = scmp.eq.s32.totalorder %s18, 0
    %p39 = por %p37, %p38
    %p40 = scmp.ne.s32.totalorder %s26, %s27
    %p41 = scmp.eq.s32.totalorder %s19, 1
    %p42 = por %p40, %p41
    %p44 = scmp.ne.s32.totalorder %s27, %s43
    %p45 = scmp.eq.s32.totalorder %s19, 0
    %p46 = por %p44, %p45
    %s48 = sadd.s32 %s47, 1
    %p51 = scmp.eq.s32.totalorder %s13, 1
    %p52 = scmp.ne.s32.totalorder %s47, %s49
    %p53 = scmp.eq.s32.totalorder %s13, 0
    %p54 = por %p52, %p53
    %p55 = scmp.ne.s32.totalorder %s47, %s49
    %p56 = scmp.eq.s32.totalorder %s18, 1
    %p57 = por %p55, %p56
    %p58 = scmp.ne.s32.totalorder %s49, %s50
    %p59 = scmp.eq.s32.totalorder %s18, 0
    %p60 = por %p58, %p59
    %p61 = scmp.ne.s32.totalorder %s49, %s50
    %p62 = scmp.eq.s32.totalorder %s19, 1
    %p63 = por %p61, %p62
    %p65 = scmp.ne.s32.totalorder %s50, %s64
    %p66 = scmp.eq.s32.totalorder %s19, 0
    %p67 = por %p65, %p66
    %s69 = sadd.s32 %s68, 1
    %p72 = scmp.eq.s32.totalorder %s13, 1
    %p73 = scmp.ne.s32.totalorder %s68, %s70
    %p74 = scmp.eq.s32.totalorder %s13, 0
    %p75 = por %p73, %p74
    %p76 = scmp.ne.s32.totalorder %s68, %s70
    %p77 = scmp.eq.s32.totalorder %s18, 1
    %p78 = por %p76, %p77
    %p79 = scmp.ne.s32.totalorder %s70, %s71
    %p80 = scmp.eq.s32.totalorder %s18, 0
    %p81 = por %p79, %p80
    %p82 = scmp.ne.s32.totalorder %s70, %s71
    %p83 = scmp.eq.s32.totalorder %s19, 1
    %p84 = por %p82, %p83
    %p86 = scmp.ne.s32.totalorder %s71, %s85
    %p87 = scmp.eq.s32.totalorder %s19, 0
    %p88 = por %p86, %p87
    %s90 = sadd.s32 %s89, 1
    %p93 = scmp.eq.s32.totalorder %s13, 1
    %p94 = scmp.ne.s32.totalorder %s89, %s91
    %p95 = scmp.eq.s32.totalorder %s13, 0
    %p96 = por %p94, %p95
    %p97 = scmp.ne.s32.totalorder %s89, %s91
    %p98 = scmp.eq.s32.totalorder %s18, 1
    %p99 = por %p97, %p98
    %p100 = scmp.ne.s32.totalorder %s91, %s92
    %p101 = scmp.eq.s32.totalorder %s18, 0
    %p102 = por %p100, %p101
    %p103 = scmp.ne.s32.totalorder %s91, %s92
    %p104 = scmp.eq.s32.totalorder %s19, 1
    %p105 = por %p103, %p104
    %p107 = scmp.ne.s32.totalorder %s92, %s106
    %p108 = scmp.eq.s32.totalorder %s19, 0
    %p109 = por %p107, %p108
    %s111 = sadd.s32 %s110, 1
    %p114 = scmp.eq.s32.totalorder %s13, 1
    %p115 = scmp.ne.s32.totalorder %s110, %s112
    %p116 = scmp.eq.s32.totalorder %s13, 0
    %p117 = por %p115, %p116
    %p118 = scmp.ne.s32.totalorder %s110, %s112
    %p119 = scmp.eq.s32.totalorder %s18, 1
    %p120 = por %p118, %p119
    %p121 = scmp.ne.s32.totalorder %s112, %s113
    %p122 = scmp.eq.s32.totalorder %s18, 0
    %p123 = por %p121, %p122
    %p124 = scmp.ne.s32.totalorder %s112, %s113
    %p125 = scmp.eq.s32.totalorder %s19, 1
    %p126 = por %p124, %p125
    %p128 = scmp.ne.s32.totalorder %s113, %s127
    %p129 = scmp.eq.s32.totalorder %s19, 0
    %p130 = por %p128, %p129
    %s132 = sadd.s32 %s131, 1
    %p135 = scmp.eq.s32.totalorder %s13, 1
    %p136 = scmp.ne.s32.totalorder %s131, %s133
    %p137 = scmp.eq.s32.totalorder %s13, 0
    %p138 = por %p136, %p137
    %p139 = scmp.ne.s32.totalorder %s131, %s133
    %p140 = scmp.eq.s32.totalorder %s18, 1
    %p141 = por %p139, %p140
    %p142 = scmp.ne.s32.totalorder %s133, %s134
    %p143 = scmp.eq.s32.totalorder %s18, 0
    %p144 = por %p142, %p143
    %p145 = scmp.ne.s32.totalorder %s133, %s134
    %p146 = scmp.eq.s32.totalorder %s19, 1
    %p147 = por %p145, %p146
    %p149 = scmp.ne.s32.totalorder %s134, %s148
    %p150 = scmp.eq.s32.totalorder %s19, 0
    %p151 = por %p149, %p150
    %s153 = sadd.s32 %s152, 1
    %p156 = scmp.eq.s32.totalorder %s13, 1
    %p157 = scmp.ne.s32.totalorder %s152, %s154
    %p158 = scmp.eq.s32.totalorder %s13, 0
    %p159 = por %p157, %p158
    %p160 = scmp.ne.s32.totalorder %s152, %s154
    %p161 = scmp.eq.s32.totalorder %s18, 1
    %p162 = por %p160, %p161
    %p163 = scmp.ne.s32.totalorder %s154, %s155
    %p164 = scmp.eq.s32.totalorder %s18, 0
    %p165 = por %p163, %p164
    %p166 = scmp.ne.s32.totalorder %s154, %s155
    %p167 = scmp.eq.s32.totalorder %s19, 1
    %p168 = por %p166, %p167
    %p170 = scmp.ne.s32.totalorder %s155, %s169
    %p171 = scmp.eq.s32.totalorder %s19, 0
    %p172 = por %p170, %p171
    %s173 = ssub.s32 %s13, %s20
    %p174 = scmp.eq.s32.totalorder %s173, 0
    %s176 = sadd.s32 %s175, 1
    %s177 = scalar_select %p174, %s175, %s176
    %p180 = pneg %p174
    %p181 = scmp.eq.s32.totalorder %s13, 1
    %p182 = por %p180, %p181
    %p183 = scmp.ne.s32.totalorder %s175, %s178
    %p184 = scmp.eq.s32.totalorder %s13, 0
    %p185 = por %p183, %p184
    %p186 = scmp.ne.s32.totalorder %s175, %s178
    %p187 = scmp.eq.s32.totalorder %s18, 1
    %p188 = por %p186, %p187
    %p189 = scmp.ne.s32.totalorder %s178, %s179
    %p190 = scmp.eq.s32.totalorder %s18, 0
    %p191 = por %p189, %p190
    %p192 = scmp.ne.s32.totalorder %s178, %s179
    %p193 = scmp.eq.s32.totalorder %s19, 1
    %p194 = por %p192, %p193
    %p196 = scmp.ne.s32.totalorder %s179, %s195
    %p197 = scmp.eq.s32.totalorder %s19, 0
    %p198 = por %p196, %p197
    %p199 = scmp.le.s32.totalorder 1, %s13
    %p200 = scmp.lt.s32.totalorder %s13, 3
    %p201 = pnand %p199, %p200
    %p202 = pneg %p201
    // Predicated region
    $region9: #{pagenet_forward.1} parent=5 // pred_check
      _
    $region10: #{pagenet_forward.1} parent=5 // pred_check_branch
      %204 = sbr.rel (%p201) target = $region12
    $region11: #{pagenet_forward.1} parent=5 // pred_region
      %s205 = ssub.s32 %s13, 1
      // Predicated region
      $region13: #{pagenet_forward.1} parent=11 // pred_check
        %p206 = pneg %p60
      $region14: #{pagenet_forward.1} parent=11 // pred_check_branch
        %208 = sbr.rel (%p206) target = $region16
      $region15: #{pagenet_forward.1} parent=11 // pred_region
        _
      $region16: #{pagenet_forward.1} parent=11 // pred_fallthru
        _
      // Predicated region
      $region17: #{pagenet_forward.1} parent=11 // pred_check
        %p209 = pneg %p81
      $region18: #{pagenet_forward.1} parent=11 // pred_check_branch
        %211 = sbr.rel (%p209) target = $region20
      $region19: #{pagenet_forward.1} parent=11 // pred_region
        _
      $region20: #{pagenet_forward.1} parent=11 // pred_fallthru
        _
      // Predicated region
      $region21: #{pagenet_forward.1} parent=11 // pred_check
        %p212 = pneg %p102
      $region22: #{pagenet_forward.1} parent=11 // pred_check_branch
        %214 = sbr.rel (%p212) target = $region24
      $region23: #{pagenet_forward.1} parent=11 // pred_region
        _
      $region24: #{pagenet_forward.1} parent=11 // pred_fallthru
        _
      // Predicated region
      $region25: #{pagenet_forward.1} parent=11 // pred_check
        %p215 = pneg %p123
      $region26: #{pagenet_forward.1} parent=11 // pred_check_branch
        %217 = sbr.rel (%p215) target = $region28
      $region27: #{pagenet_forward.1} parent=11 // pred_region
        _
      $region28: #{pagenet_forward.1} parent=11 // pred_fallthru
        _
      // Predicated region
      $region29: #{pagenet_forward.1} parent=11 // pred_check
        %p218 = pneg %p144
      $region30: #{pagenet_forward.1} parent=11 // pred_check_branch
        %220 = sbr.rel (%p218) target = $region32
      $region31: #{pagenet_forward.1} parent=11 // pred_region
        _
      $region32: #{pagenet_forward.1} parent=11 // pred_fallthru
        _
      // Predicated region
      $region33: #{pagenet_forward.1} parent=11 // pred_check
        %p221 = pneg %p165
      $region34: #{pagenet_forward.1} parent=11 // pred_check_branch
        %223 = sbr.rel (%p221) target = $region36
      $region35: #{pagenet_forward.1} parent=11 // pred_region
        _
      $region36: #{pagenet_forward.1} parent=11 // pred_fallthru
        _
    $region12: #{pagenet_forward.1} parent=5 // pred_fallthru
      _
    %p224 = scmp.lt.s32.totalorder %s13, 2
    // Predicated region
    $region37: #{pagenet_forward.1} parent=5 // pred_check
      %p225 = pneg %p224
    $region38: #{pagenet_forward.1} parent=5 // pred_check_branch
      %227 = sbr.rel (%p225) target = $region40
    $region39: #{pagenet_forward.1} parent=5 // pred_region
      // Predicated region
      $region41: #{pagenet_forward.1} parent=39 // pred_check
        %p228 = pneg %p33
      $region42: #{pagenet_forward.1} parent=39 // pred_check_branch
        %230 = sbr.rel (%p228) target = $region44
      $region43: #{pagenet_forward.1} parent=39 // pred_region
        %p231 = scmp.lt.s32.totalorder %s13, 1
        %s232 = scalar_select %p231, %s13, 1
        %s233 = smul.addr %s232, 54
        %s234 = smul.addr %s233, 8
        %s235 = scalar_lea.vmem %s0, %s234
      $region44: #{pagenet_forward.1} parent=39 // pred_fallthru
        _
    $region40: #{pagenet_forward.1} parent=5 // pred_fallthru
      _
    %p236 = scmp.le.s32.totalorder 1, %s13
    %p237 = scmp.lt.s32.totalorder %s13, 3
    %p238 = pnand %p236, %p237
    %p239 = pneg %p238
    // Predicated region
    $region45: #{pagenet_forward.1} parent=5 // pred_check
      _
    $region46: #{pagenet_forward.1} parent=5 // pred_check_branch
      %241 = sbr.rel (%p238) target = $region48
    $region47: #{pagenet_forward.1} parent=5 // pred_region
      %s242 = ssub.s32 %s13, 1
      %p243 = scmp.lt.s32.totalorder %s18, 1
      %s244 = scalar_select %p243, %s18, 1
      %s245 = smul.addr %s244, 54
      %s246 = smul.addr %s245, 8
      %s247 = scalar_lea.vmem %s0, %s246
      %p248 = pneg %p39
      %p249 = pneg %p36
      %p250 = pneg %p60
      %p251 = pneg %p57
      %p252 = pneg %p81
      %p253 = pneg %p78
      %p254 = pneg %p102
      %p255 = pneg %p99
      %p256 = pneg %p123
      %p257 = pneg %p120
      %p258 = pneg %p144
      %p259 = pneg %p141
      %p260 = pneg %p165
      %p261 = pneg %p162
      %p262 = pneg %p191
      %p263 = pneg %p188
      %s264 = smul.u32 32, %s18
      %p265 = scmp.lt.s32.totalorder %s264, 63
      %s266 = scalar_select %p265, %s264, 63
      %s267 = smul.addr %s266, 8
      %s268 = scalar_lea.vmem %s7, %s267
      %p269 = scmp.lt.s32.totalorder %s18, 1
      %s270 = scalar_select %p269, %s18, 1
      %s271 = smul.addr %s270, 54
      %s272 = smul.addr %s271, 8
      %s273 = scalar_lea.vmem %s0, %s272
      %s274 = smul.u32 32, %s18
      %p275 = scmp.lt.s32.totalorder %s274, 63
      %s276 = scalar_select %p275, %s274, 63
      %s277 = smul.addr %s276, 8
      %s278 = scalar_lea.vmem %s7, %s277
      %s279 = smul.u32 32, %s18
      %v281 = vld [vmem:[%s273] sm:$0xff]
      %v282 = vld [vmem:[%s273 + $0x8] sm:$0xff]
      %v283 = vld [vmem:[%s273 + $0x18] sm:$0xff]
      %v284 = vld [vmem:[%s273 + $0x20] sm:$0xff]
      %v285 = vld [vmem:[%s273 + $0x30] sm:$0xff]
      %v286 = vld [vmem:[%s273 + $0x38] sm:$0xff]
      %v287 = vld [vmem:[%s273 + $0x48] sm:$0xff]
      %v288 = vld [vmem:[%s273 + $0x50] sm:$0xff]
      %v289 = vld [vmem:[%s273 + $0x60] sm:$0xff]
      %v290 = vld [vmem:[%s273 + $0x68] sm:$0xff]
      %v291 = vld [vmem:[%s273 + $0x78] sm:$0xff]
      %v292 = vld [vmem:[%s273 + $0x80] sm:$0xff]
      %v293 = vld [vmem:[%s273 + $0x90] sm:$0xff]
      %v294 = vld [vmem:[%s273 + $0x98] sm:$0xff]
      %v295 = vld [vmem:[%s273 + $0xa8] sm:$0xff]
      %v296 = vld [vmem:[%s273 + $0xb0] sm:$0xff]
      %v297 = vld [vmem:[%s273 + $0xc0] sm:$0xff]
      %v298 = vld [vmem:[%s273 + $0xc8] sm:$0xff]
      %v299 = vld [vmem:[%s273 + $0xd8] sm:$0xff]
      %v300 = vld [vmem:[%s273 + $0xe0] sm:$0xff]
      %v301 = vld [vmem:[%s273 + $0xf0] sm:$0xff]
      %v302 = vld [vmem:[%s273 + $0xf8] sm:$0xff]
      %v303 = vld [vmem:[%s273 + $0x108] sm:$0xff]
      %v304 = vld [vmem:[%s273 + $0x110] sm:$0xff]
      %v305 = vld [vmem:[%s273 + $0x120] sm:$0xff]
      %v306 = vld [vmem:[%s273 + $0x128] sm:$0xff]
      %v307 = vld [vmem:[%s273 + $0x138] sm:$0xff]
      %v308 = vld [vmem:[%s273 + $0x140] sm:$0xff]
      %v309 = vld [vmem:[%s273 + $0x150] sm:$0xff]
      %v310 = vld [vmem:[%s273 + $0x158] sm:$0xff]
      %v311 = vld [vmem:[%s273 + $0x168] sm:$0xff]
      %v312 = vld [vmem:[%s273 + $0x170] sm:$0xff]
      %v313 = vpack.c.bf16 %v282, %v281
      %v314 = vpack.c.bf16 %v284, %v283
      %v315 = vpack.c.bf16 %v286, %v285
      %v316 = vpack.c.bf16 %v288, %v287
      %v317 = vpack.c.bf16 %v290, %v289
      %v318 = vpack.c.bf16 %v292, %v291
      %v319 = vpack.c.bf16 %v294, %v293
      %v320 = vpack.c.bf16 %v296, %v295
      %v321 = vpack.c.bf16 %v298, %v297
      %v322 = vpack.c.bf16 %v300, %v299
      %v323 = vpack.c.bf16 %v302, %v301
      %v324 = vpack.c.bf16 %v304, %v303
      %v325 = vpack.c.bf16 %v306, %v305
      %v326 = vpack.c.bf16 %v308, %v307
      %v327 = vpack.c.bf16 %v310, %v309
      %v328 = vpack.c.bf16 %v312, %v311
      %v329 = vld [vmem:[%s1] sm:$0x3]
      %v330 = vld [vmem:[%s273 + $0x1] sm:$0xff]
      %v331 = vld [vmem:[%s273 + $0x9] sm:$0xff]
      %v332 = vld [vmem:[%s273 + $0x19] sm:$0xff]
      %v333 = vld [vmem:[%s273 + $0x21] sm:$0xff]
      %v334 = vld [vmem:[%s273 + $0x31] sm:$0xff]
      %v335 = vld [vmem:[%s273 + $0x39] sm:$0xff]
      %v336 = vld [vmem:[%s273 + $0x49] sm:$0xff]
      %v337 = vld [vmem:[%s273 + $0x51] sm:$0xff]
      %v338 = vld [vmem:[%s273 + $0x61] sm:$0xff]
      %v339 = vld [vmem:[%s273 + $0x69] sm:$0xff]
      %v340 = vld [vmem:[%s273 + $0x79] sm:$0xff]
      %v341 = vld [vmem:[%s273 + $0x81] sm:$0xff]
      %v342 = vld [vmem:[%s273 + $0x91] sm:$0xff]
      %v343 = vld [vmem:[%s273 + $0x99] sm:$0xff]
      %v344 = vld [vmem:[%s273 + $0xa9] sm:$0xff]
      %v345 = vld [vmem:[%s273 + $0xb1] sm:$0xff]
      %v346 = vld [vmem:[%s273 + $0xc1] sm:$0xff]
      %v347 = vld [vmem:[%s273 + $0xc9] sm:$0xff]
      %v348 = vld [vmem:[%s273 + $0xd9] sm:$0xff]
      %v349 = vld [vmem:[%s273 + $0xe1] sm:$0xff]
      %v350 = vld [vmem:[%s273 + $0xf1] sm:$0xff]
      %v351 = vld [vmem:[%s273 + $0xf9] sm:$0xff]
      %v352 = vld [vmem:[%s273 + $0x109] sm:$0xff]
      %v353 = vld [vmem:[%s273 + $0x111] sm:$0xff]
      %v354 = vld [vmem:[%s273 + $0x121] sm:$0xff]
      %v355 = vld [vmem:[%s273 + $0x129] sm:$0xff]
      %v356 = vld [vmem:[%s273 + $0x139] sm:$0xff]
      %v357 = vld [vmem:[%s273 + $0x141] sm:$0xff]
      %v358 = vld [vmem:[%s273 + $0x151] sm:$0xff]
      %v359 = vld [vmem:[%s273 + $0x159] sm:$0xff]
      %v360 = vld [vmem:[%s273 + $0x169] sm:$0xff]
      %v361 = vld [vmem:[%s273 + $0x171] sm:$0xff]
      %v362 = vpack.c.bf16 %v331, %v330
      %v363 = vpack.c.bf16 %v333, %v332
      %v364 = vpack.c.bf16 %v335, %v334
      %v365 = vpack.c.bf16 %v337, %v336
      %v366 = vpack.c.bf16 %v339, %v338
      %v367 = vpack.c.bf16 %v341, %v340
      %v368 = vpack.c.bf16 %v343, %v342
      %v369 = vpack.c.bf16 %v345, %v344
      %v370 = vpack.c.bf16 %v347, %v346
      %v371 = vpack.c.bf16 %v349, %v348
      %v372 = vpack.c.bf16 %v351, %v350
      %v373 = vpack.c.bf16 %v353, %v352
      %v374 = vpack.c.bf16 %v355, %v354
      %v375 = vpack.c.bf16 %v357, %v356
      %v376 = vpack.c.bf16 %v359, %v358
      %v377 = vpack.c.bf16 %v361, %v360
      %s378 = scalar_lea.vmem %s1, 2
      %v379 = vld [vmem:[%s378] sm:$0x3]
      %vm380 = vcmask 31744
      %v382 = vsel %vm380, %v362, 0
      %v385 = vsel %vm380, %v363, 0
      %v388 = vsel %vm380, %v364, 0
      %v391 = vsel %vm380, %v365, 0
      %v394 = vsel %vm380, %v366, 0
      %v397 = vsel %vm380, %v367, 0
      %v400 = vsel %vm380, %v368, 0
      %v403 = vsel %vm380, %v369, 0
      %v406 = vsel %vm380, %v370, 0
      %v409 = vsel %vm380, %v371, 0
      %v412 = vsel %vm380, %v372, 0
      %v415 = vsel %vm380, %v373, 0
      %v418 = vsel %vm380, %v374, 0
      %v421 = vsel %vm380, %v375, 0
      %v424 = vsel %vm380, %v376, 0
      %v427 = vsel %vm380, %v377, 0
      %vm429 = vcmask 1041408
      %v431 = vsel %vm429, %v379, 0
      %433 = vmatpush.bf16.msra.mxu0 0
      %434 = vmatpush.bf16.msra.mxu0 0
      %435 = vmatpush.bf16.msra.mxu0 0
      %436 = vmatpush.bf16.msra.mxu0 0
      %437 = vmatpush.bf16.msra.mxu0 0
      %438 = vmatpush.bf16.msra.mxu0 0
      %439 = vmatpush.bf16.msra.mxu0 0
      %440 = vmatpush.bf16.msra.mxu0 %v431
      %441 = vmatmul.bf16.gmra.mxu0 %v382
      %v442 = vpop.f32.mrf.mxu0
      %v443 = vadd.f32 0.0, %v442
      %v444 = vpop.f32.mrf.mxu0
      %v445 = vadd.f32 0.0, %v444
      %446 = vmatmul.bf16.gmra.mxu0 %v385
      %v447 = vpop.f32.mrf.mxu0
      %v448 = vadd.f32 0.0, %v447
      %v449 = vpop.f32.mrf.mxu0
      %v450 = vadd.f32 0.0, %v449
      %451 = vmatmul.bf16.gmra.mxu0 %v388
      %v452 = vpop.f32.mrf.mxu0
      %v453 = vadd.f32 0.0, %v452
      %v454 = vpop.f32.mrf.mxu0
      %v455 = vadd.f32 0.0, %v454
      %456 = vmatmul.bf16.gmra.mxu0 %v391
      %v457 = vpop.f32.mrf.mxu0
      %v458 = vadd.f32 0.0, %v457
      %v459 = vpop.f32.mrf.mxu0
      %v460 = vadd.f32 0.0, %v459
      %461 = vmatmul.bf16.gmra.mxu0 %v394
      %v462 = vpop.f32.mrf.mxu0
      %v463 = vadd.f32 0.0, %v462
      %v464 = vpop.f32.mrf.mxu0
      %v465 = vadd.f32 0.0, %v464
      %466 = vmatmul.bf16.gmra.mxu0 %v397
      %v467 = vpop.f32.mrf.mxu0
      %v468 = vadd.f32 0.0, %v467
      %v469 = vpop.f32.mrf.mxu0
      %v470 = vadd.f32 0.0, %v469
      %471 = vmatmul.bf16.gmra.mxu0 %v400
      %v472 = vpop.f32.mrf.mxu0
      %v473 = vadd.f32 0.0, %v472
      %v474 = vpop.f32.mrf.mxu0
      %v475 = vadd.f32 0.0, %v474
      %476 = vmatmul.bf16.gmra.mxu0 %v403
      %v477 = vpop.f32.mrf.mxu0
      %v478 = vadd.f32 0.0, %v477
      %v479 = vpop.f32.mrf.mxu0
      %v480 = vadd.f32 0.0, %v479
      %481 = vmatmul.bf16.gmra.mxu0 %v406
      %v482 = vpop.f32.mrf.mxu0
      %v483 = vadd.f32 0.0, %v482
      %v484 = vpop.f32.mrf.mxu0
      %v485 = vadd.f32 0.0, %v484
      %486 = vmatmul.bf16.gmra.mxu0 %v409
      %v487 = vpop.f32.mrf.mxu0
      %v488 = vadd.f32 0.0, %v487
      %v489 = vpop.f32.mrf.mxu0
      %v490 = vadd.f32 0.0, %v489
      %491 = vmatmul.bf16.gmra.mxu0 %v412
      %v492 = vpop.f32.mrf.mxu0
      %v493 = vadd.f32 0.0, %v492
      %v494 = vpop.f32.mrf.mxu0
      %v495 = vadd.f32 0.0, %v494
      %496 = vmatmul.bf16.gmra.mxu0 %v415
      %v497 = vpop.f32.mrf.mxu0
      %v498 = vadd.f32 0.0, %v497
      %v499 = vpop.f32.mrf.mxu0
      %v500 = vadd.f32 0.0, %v499
      %501 = vmatmul.bf16.gmra.mxu0 %v418
      %v502 = vpop.f32.mrf.mxu0
      %v503 = vadd.f32 0.0, %v502
      %v504 = vpop.f32.mrf.mxu0
      %v505 = vadd.f32 0.0, %v504
      %506 = vmatmul.bf16.gmra.mxu0 %v421
      %v507 = vpop.f32.mrf.mxu0
      %v508 = vadd.f32 0.0, %v507
      %v509 = vpop.f32.mrf.mxu0
      %v510 = vadd.f32 0.0, %v509
      %511 = vmatmul.bf16.gmra.mxu0 %v424
      %v512 = vpop.f32.mrf.mxu0
      %v513 = vadd.f32 0.0, %v512
      %v514 = vpop.f32.mrf.mxu0
      %v515 = vadd.f32 0.0, %v514
      %516 = vmatmul.bf16.gmra.mxu0 %v427
      %v517 = vpop.f32.mrf.mxu0
      %v518 = vadd.f32 0.0, %v517
      %v519 = vpop.f32.mrf.mxu0
      %v520 = vadd.f32 0.0, %v519
      %521 = vdwg.mxu0
      %v523 = vsel %vm380, %v313, 0
      %v526 = vsel %vm380, %v314, 0
      %v529 = vsel %vm380, %v315, 0
      %v532 = vsel %vm380, %v316, 0
      %v535 = vsel %vm380, %v317, 0
      %v538 = vsel %vm380, %v318, 0
      %v541 = vsel %vm380, %v319, 0
      %v544 = vsel %vm380, %v320, 0
      %v547 = vsel %vm380, %v321, 0
      %v550 = vsel %vm380, %v322, 0
      %v553 = vsel %vm380, %v323, 0
      %v556 = vsel %vm380, %v324, 0
      %v559 = vsel %vm380, %v325, 0
      %v562 = vsel %vm380, %v326, 0
      %v565 = vsel %vm380, %v327, 0
      %v568 = vsel %vm380, %v328, 0
      %v571 = vsel %vm429, %v329, 0
      %573 = vmatpush.bf16.msra.mxu0 0
      %574 = vmatpush.bf16.msra.mxu0 0
      %575 = vmatpush.bf16.msra.mxu0 0
      %576 = vmatpush.bf16.msra.mxu0 0
      %577 = vmatpush.bf16.msra.mxu0 0
      %578 = vmatpush.bf16.msra.mxu0 0
      %579 = vmatpush.bf16.msra.mxu0 0
      %580 = vmatpush.bf16.msra.mxu0 %v571
      %581 = vmatmul.bf16.gmra.mxu0 %v523
      %v582 = vpop.f32.mrf.mxu0
      %v583 = vadd.f32 %v443, %v582
      %v584 = vpop.f32.mrf.mxu0
      %v585 = vadd.f32 %v445, %v584
      %586 = vmatmul.bf16.gmra.mxu0 %v526
      %v587 = vpop.f32.mrf.mxu0
      %v588 = vadd.f32 %v448, %v587
      %v589 = vpop.f32.mrf.mxu0
      %v590 = vadd.f32 %v450, %v589
      %591 = vmatmul.bf16.gmra.mxu0 %v529
      %v592 = vpop.f32.mrf.mxu0
      %v593 = vadd.f32 %v453, %v592
      %v594 = vpop.f32.mrf.mxu0
      %v595 = vadd.f32 %v455, %v594
      %596 = vmatmul.bf16.gmra.mxu0 %v532
      %v597 = vpop.f32.mrf.mxu0
      %v598 = vadd.f32 %v458, %v597
      %v599 = vpop.f32.mrf.mxu0
      %v600 = vadd.f32 %v460, %v599
      %601 = vmatmul.bf16.gmra.mxu0 %v535
      %v602 = vpop.f32.mrf.mxu0
      %v603 = vadd.f32 %v463, %v602
      %v604 = vpop.f32.mrf.mxu0
      %v605 = vadd.f32 %v465, %v604
      %606 = vmatmul.bf16.gmra.mxu0 %v538
      %v607 = vpop.f32.mrf.mxu0
      %v608 = vadd.f32 %v468, %v607
      %v609 = vpop.f32.mrf.mxu0
      %v610 = vadd.f32 %v470, %v609
      %611 = vmatmul.bf16.gmra.mxu0 %v541
      %v612 = vpop.f32.mrf.mxu0
      %v613 = vadd.f32 %v473, %v612
      %v614 = vpop.f32.mrf.mxu0
      %v615 = vadd.f32 %v475, %v614
      %616 = vmatmul.bf16.gmra.mxu0 %v544
      %v617 = vpop.f32.mrf.mxu0
      %v618 = vadd.f32 %v478, %v617
      %v619 = vpop.f32.mrf.mxu0
      %v620 = vadd.f32 %v480, %v619
      %621 = vmatmul.bf16.gmra.mxu0 %v547
      %v622 = vpop.f32.mrf.mxu0
      %v623 = vadd.f32 %v483, %v622
      %v624 = vpop.f32.mrf.mxu0
      %v625 = vadd.f32 %v485, %v624
      %626 = vmatmul.bf16.gmra.mxu0 %v550
      %v627 = vpop.f32.mrf.mxu0
      %v628 = vadd.f32 %v488, %v627
      %v629 = vpop.f32.mrf.mxu0
      %v630 = vadd.f32 %v490, %v629
      %631 = vmatmul.bf16.gmra.mxu0 %v553
      %v632 = vpop.f32.mrf.mxu0
      %v633 = vadd.f32 %v493, %v632
      %v634 = vpop.f32.mrf.mxu0
      %v635 = vadd.f32 %v495, %v634
      %636 = vmatmul.bf16.gmra.mxu0 %v556
      %v637 = vpop.f32.mrf.mxu0
      %v638 = vadd.f32 %v498, %v637
      %v639 = vpop.f32.mrf.mxu0
      %v640 = vadd.f32 %v500, %v639
      %641 = vmatmul.bf16.gmra.mxu0 %v559
      %v642 = vpop.f32.mrf.mxu0
      %v643 = vadd.f32 %v503, %v642
      %v644 = vpop.f32.mrf.mxu0
      %v645 = vadd.f32 %v505, %v644
      %646 = vmatmul.bf16.gmra.mxu0 %v562
      %v647 = vpop.f32.mrf.mxu0
      %v648 = vadd.f32 %v508, %v647
      %v649 = vpop.f32.mrf.mxu0
      %v650 = vadd.f32 %v510, %v649
      %651 = vmatmul.bf16.gmra.mxu0 %v565
      %v652 = vpop.f32.mrf.mxu0
      %v653 = vadd.f32 %v513, %v652
      %v654 = vpop.f32.mrf.mxu0
      %v655 = vadd.f32 %v515, %v654
      %656 = vmatmul.bf16.gmra.mxu0 %v568
      %v657 = vpop.f32.mrf.mxu0
      %v658 = vadd.f32 %v518, %v657
      %v659 = vpop.f32.mrf.mxu0
      %v660 = vadd.f32 %v520, %v659
      %661 = vdwg.mxu0
      %v662 = vld [vmem:[%s273 + $0x2] sm:$0xff]
      %v663 = vld [vmem:[%s273 + $0xa] sm:$0xff]
      %v664 = vld [vmem:[%s273 + $0x1a] sm:$0xff]
      %v665 = vld [vmem:[%s273 + $0x22] sm:$0xff]
      %v666 = vld [vmem:[%s273 + $0x32] sm:$0xff]
      %v667 = vld [vmem:[%s273 + $0x3a] sm:$0xff]
      %v668 = vld [vmem:[%s273 + $0x4a] sm:$0xff]
      %v669 = vld [vmem:[%s273 + $0x52] sm:$0xff]
      %v670 = vld [vmem:[%s273 + $0x62] sm:$0xff]
      %v671 = vld [vmem:[%s273 + $0x6a] sm:$0xff]
      %v672 = vld [vmem:[%s273 + $0x7a] sm:$0xff]
      %v673 = vld [vmem:[%s273 + $0x82] sm:$0xff]
      %v674 = vld [vmem:[%s273 + $0x92] sm:$0xff]
      %v675 = vld [vmem:[%s273 + $0x9a] sm:$0xff]
      %v676 = vld [vmem:[%s273 + $0xaa] sm:$0xff]
      %v677 = vld [vmem:[%s273 + $0xb2] sm:$0xff]
      %v678 = vld [vmem:[%s273 + $0xc2] sm:$0xff]
      %v679 = vld [vmem:[%s273 + $0xca] sm:$0xff]
      %v680 = vld [vmem:[%s273 + $0xda] sm:$0xff]
      %v681 = vld [vmem:[%s273 + $0xe2] sm:$0xff]
      %v682 = vld [vmem:[%s273 + $0xf2] sm:$0xff]
      %v683 = vld [vmem:[%s273 + $0xfa] sm:$0xff]
      %v684 = vld [vmem:[%s273 + $0x10a] sm:$0xff]
      %v685 = vld [vmem:[%s273 + $0x112] sm:$0xff]
      %v686 = vld [vmem:[%s273 + $0x122] sm:$0xff]
      %v687 = vld [vmem:[%s273 + $0x12a] sm:$0xff]
      %v688 = vld [vmem:[%s273 + $0x13a] sm:$0xff]
      %v689 = vld [vmem:[%s273 + $0x142] sm:$0xff]
      %v690 = vld [vmem:[%s273 + $0x152] sm:$0xff]
      %v691 = vld [vmem:[%s273 + $0x15a] sm:$0xff]
      %v692 = vld [vmem:[%s273 + $0x16a] sm:$0xff]
      %v693 = vld [vmem:[%s273 + $0x172] sm:$0xff]
      %v694 = vpack.c.bf16 %v663, %v662
      %v695 = vpack.c.bf16 %v665, %v664
      %v696 = vpack.c.bf16 %v667, %v666
      %v697 = vpack.c.bf16 %v669, %v668
      %v698 = vpack.c.bf16 %v671, %v670
      %v699 = vpack.c.bf16 %v673, %v672
      %v700 = vpack.c.bf16 %v675, %v674
      %v701 = vpack.c.bf16 %v677, %v676
      %v702 = vpack.c.bf16 %v679, %v678
      %v703 = vpack.c.bf16 %v681, %v680
      %v704 = vpack.c.bf16 %v683, %v682
      %v705 = vpack.c.bf16 %v685, %v684
      %v706 = vpack.c.bf16 %v687, %v686
      %v707 = vpack.c.bf16 %v689, %v688
      %v708 = vpack.c.bf16 %v691, %v690
      %v709 = vpack.c.bf16 %v693, %v692
      %s710 = scalar_lea.vmem %s1, 4
      %v711 = vld [vmem:[%s710] sm:$0x3]
      %v713 = vsel %vm380, %v694, 0
      %v716 = vsel %vm380, %v695, 0
      %v719 = vsel %vm380, %v696, 0
      %v722 = vsel %vm380, %v697, 0
      %v725 = vsel %vm380, %v698, 0
      %v728 = vsel %vm380, %v699, 0
      %v731 = vsel %vm380, %v700, 0
      %v734 = vsel %vm380, %v701, 0
      %v737 = vsel %vm380, %v702, 0
      %v740 = vsel %vm380, %v703, 0
      %v743 = vsel %vm380, %v704, 0
      %v746 = vsel %vm380, %v705, 0
      %v749 = vsel %vm380, %v706, 0
      %v752 = vsel %vm380, %v707, 0
      %v755 = vsel %vm380, %v708, 0
      %v758 = vsel %vm380, %v709, 0
      %v761 = vsel %vm429, %v711, 0
      %763 = vmatpush.bf16.msra.mxu0 0
      %764 = vmatpush.bf16.msra.mxu0 0
      %765 = vmatpush.bf16.msra.mxu0 0
      %766 = vmatpush.bf16.msra.mxu0 0
      %767 = vmatpush.bf16.msra.mxu0 0
      %768 = vmatpush.bf16.msra.mxu0 0
      %769 = vmatpush.bf16.msra.mxu0 0
      %770 = vmatpush.bf16.msra.mxu0 %v761
      %771 = vmatmul.bf16.gmra.mxu0 %v713
      %v772 = vpop.f32.mrf.mxu0
      %v773 = vadd.f32 0.0, %v772
      %v774 = vpop.f32.mrf.mxu0
      %v775 = vadd.f32 0.0, %v774
      %776 = vmatmul.bf16.gmra.mxu0 %v716
      %v777 = vpop.f32.mrf.mxu0
      %v778 = vadd.f32 0.0, %v777
      %v779 = vpop.f32.mrf.mxu0
      %v780 = vadd.f32 0.0, %v779
      %781 = vmatmul.bf16.gmra.mxu0 %v719
      %v782 = vpop.f32.mrf.mxu0
      %v783 = vadd.f32 0.0, %v782
      %v784 = vpop.f32.mrf.mxu0
      %v785 = vadd.f32 0.0, %v784
      %786 = vmatmul.bf16.gmra.mxu0 %v722
      %v787 = vpop.f32.mrf.mxu0
      %v788 = vadd.f32 0.0, %v787
      %v789 = vpop.f32.mrf.mxu0
      %v790 = vadd.f32 0.0, %v789
      %791 = vmatmul.bf16.gmra.mxu0 %v725
      %v792 = vpop.f32.mrf.mxu0
      %v793 = vadd.f32 0.0, %v792
      %v794 = vpop.f32.mrf.mxu0
      %v795 = vadd.f32 0.0, %v794
      %796 = vmatmul.bf16.gmra.mxu0 %v728
      %v797 = vpop.f32.mrf.mxu0
      %v798 = vadd.f32 0.0, %v797
      %v799 = vpop.f32.mrf.mxu0
      %v800 = vadd.f32 0.0, %v799
      %801 = vmatmul.bf16.gmra.mxu0 %v731
      %v802 = vpop.f32.mrf.mxu0
      %v803 = vadd.f32 0.0, %v802
      %v804 = vpop.f32.mrf.mxu0
      %v805 = vadd.f32 0.0, %v804
      %806 = vmatmul.bf16.gmra.mxu0 %v734
      %v807 = vpop.f32.mrf.mxu0
      %v808 = vadd.f32 0.0, %v807
      %v809 = vpop.f32.mrf.mxu0
      %v810 = vadd.f32 0.0, %v809
      %811 = vmatmul.bf16.gmra.mxu0 %v737
      %v812 = vpop.f32.mrf.mxu0
      %v813 = vadd.f32 0.0, %v812
      %v814 = vpop.f32.mrf.mxu0
      %v815 = vadd.f32 0.0, %v814
      %816 = vmatmul.bf16.gmra.mxu0 %v740
      %v817 = vpop.f32.mrf.mxu0
      %v818 = vadd.f32 0.0, %v817
      %v819 = vpop.f32.mrf.mxu0
      %v820 = vadd.f32 0.0, %v819
      %821 = vmatmul.bf16.gmra.mxu0 %v743
      %v822 = vpop.f32.mrf.mxu0
      %v823 = vadd.f32 0.0, %v822
      %v824 = vpop.f32.mrf.mxu0
      %v825 = vadd.f32 0.0, %v824
      %826 = vmatmul.bf16.gmra.mxu0 %v746
      %v827 = vpop.f32.mrf.mxu0
      %v828 = vadd.f32 0.0, %v827
      %v829 = vpop.f32.mrf.mxu0
      %v830 = vadd.f32 0.0, %v829
      %831 = vmatmul.bf16.gmra.mxu0 %v749
      %v832 = vpop.f32.mrf.mxu0
      %v833 = vadd.f32 0.0, %v832
      %v834 = vpop.f32.mrf.mxu0
      %v835 = vadd.f32 0.0, %v834
      %836 = vmatmul.bf16.gmra.mxu0 %v752
      %v837 = vpop.f32.mrf.mxu0
      %v838 = vadd.f32 0.0, %v837
      %v839 = vpop.f32.mrf.mxu0
      %v840 = vadd.f32 0.0, %v839
      %841 = vmatmul.bf16.gmra.mxu0 %v755
      %v842 = vpop.f32.mrf.mxu0
      %v843 = vadd.f32 0.0, %v842
      %v844 = vpop.f32.mrf.mxu0
      %v845 = vadd.f32 0.0, %v844
      %846 = vmatmul.bf16.gmra.mxu0 %v758
      %v847 = vpop.f32.mrf.mxu0
      %v848 = vadd.f32 0.0, %v847
      %v849 = vpop.f32.mrf.mxu0
      %v850 = vadd.f32 0.0, %v849
      %851 = vdwg.mxu0
      %v852 = vadd.f32 %v583, %v773
      %v853 = vadd.f32 %v585, %v775
      %v854 = vadd.f32 %v588, %v778
      %v855 = vadd.f32 %v590, %v780
      %v856 = vadd.f32 %v593, %v783
      %v857 = vadd.f32 %v595, %v785
      %v858 = vadd.f32 %v598, %v788
      %v859 = vadd.f32 %v600, %v790
      %v860 = vadd.f32 %v603, %v793
      %v861 = vadd.f32 %v605, %v795
      %v862 = vadd.f32 %v608, %v798
      %v863 = vadd.f32 %v610, %v800
      %v864 = vadd.f32 %v613, %v803
      %v865 = vadd.f32 %v615, %v805
      %v866 = vadd.f32 %v618, %v808
      %v867 = vadd.f32 %v620, %v810
      %v868 = vadd.f32 %v623, %v813
      %v869 = vadd.f32 %v625, %v815
      %v870 = vadd.f32 %v628, %v818
      %v871 = vadd.f32 %v630, %v820
      %v872 = vadd.f32 %v633, %v823
      %v873 = vadd.f32 %v635, %v825
      %v874 = vadd.f32 %v638, %v828
      %v875 = vadd.f32 %v640, %v830
      %v876 = vadd.f32 %v643, %v833
      %v877 = vadd.f32 %v645, %v835
      %v878 = vadd.f32 %v648, %v838
      %v879 = vadd.f32 %v650, %v840
      %v880 = vadd.f32 %v653, %v843
      %v881 = vadd.f32 %v655, %v845
      %v882 = vadd.f32 %v658, %v848
      %v883 = vadd.f32 %v660, %v850
      %s884 = scalar_lea.vmem %s273, 24
      %v885 = vld [vmem:[%s884] sm:$0xff]
      %v886 = vld [vmem:[%s884 + $0x8] sm:$0xff]
      %v887 = vld [vmem:[%s884 + $0x18] sm:$0xff]
      %v888 = vld [vmem:[%s884 + $0x20] sm:$0xff]
      %v889 = vld [vmem:[%s884 + $0x30] sm:$0xff]
      %v890 = vld [vmem:[%s884 + $0x38] sm:$0xff]
      %v891 = vld [vmem:[%s884 + $0x48] sm:$0xff]
      %v892 = vld [vmem:[%s884 + $0x50] sm:$0xff]
      %v893 = vld [vmem:[%s884 + $0x60] sm:$0xff]
      %v894 = vld [vmem:[%s884 + $0x68] sm:$0xff]
      %v895 = vld [vmem:[%s884 + $0x78] sm:$0xff]
      %v896 = vld [vmem:[%s884 + $0x80] sm:$0xff]
      %v897 = vld [vmem:[%s884 + $0x90] sm:$0xff]
      %v898 = vld [vmem:[%s884 + $0x98] sm:$0xff]
      %v899 = vld [vmem:[%s884 + $0xa8] sm:$0xff]
      %v900 = vld [vmem:[%s884 + $0xb0] sm:$0xff]
      %v901 = vld [vmem:[%s884 + $0xc0] sm:$0xff]
      %v902 = vld [vmem:[%s884 + $0xc8] sm:$0xff]
      %v903 = vld [vmem:[%s884 + $0xd8] sm:$0xff]
      %v904 = vld [vmem:[%s884 + $0xe0] sm:$0xff]
      %v905 = vld [vmem:[%s884 + $0xf0] sm:$0xff]
      %v906 = vld [vmem:[%s884 + $0xf8] sm:$0xff]
      %v907 = vld [vmem:[%s884 + $0x108] sm:$0xff]
      %v908 = vld [vmem:[%s884 + $0x110] sm:$0xff]
      %v909 = vld [vmem:[%s884 + $0x120] sm:$0xff]
      %v910 = vld [vmem:[%s884 + $0x128] sm:$0xff]
      %v911 = vld [vmem:[%s884 + $0x138] sm:$0xff]
      %v912 = vld [vmem:[%s884 + $0x140] sm:$0xff]
      %v913 = vld [vmem:[%s884 + $0x150] sm:$0xff]
      %v914 = vld [vmem:[%s884 + $0x158] sm:$0xff]
      %v915 = vld [vmem:[%s884 + $0x168] sm:$0xff]
      %v916 = vld [vmem:[%s884 + $0x170] sm:$0xff]
      %v917 = vpack.c.bf16 %v886, %v885
      %v918 = vpack.c.bf16 %v888, %v887
      %v919 = vpack.c.bf16 %v890, %v889
      %v920 = vpack.c.bf16 %v892, %v891
      %v921 = vpack.c.bf16 %v894, %v893
      %v922 = vpack.c.bf16 %v896, %v895
      %v923 = vpack.c.bf16 %v898, %v897
      %v924 = vpack.c.bf16 %v900, %v899
      %v925 = vpack.c.bf16 %v902, %v901
      %v926 = vpack.c.bf16 %v904, %v903
      %v927 = vpack.c.bf16 %v906, %v905
      %v928 = vpack.c.bf16 %v908, %v907
      %v929 = vpack.c.bf16 %v910, %v909
      %v930 = vpack.c.bf16 %v912, %v911
      %v931 = vpack.c.bf16 %v914, %v913
      %v932 = vpack.c.bf16 %v916, %v915
      %s933 = scalar_lea.vmem %s1, 6
      %v934 = vld [vmem:[%s933] sm:$0x3]
      %v936 = vsel %vm380, %v917, 0
      %v939 = vsel %vm380, %v918, 0
      %v942 = vsel %vm380, %v919, 0
      %v945 = vsel %vm380, %v920, 0
      %v948 = vsel %vm380, %v921, 0
      %v951 = vsel %vm380, %v922, 0
      %v954 = vsel %vm380, %v923, 0
      %v957 = vsel %vm380, %v924, 0
      %v960 = vsel %vm380, %v925, 0
      %v963 = vsel %vm380, %v926, 0
      %v966 = vsel %vm380, %v927, 0
      %v969 = vsel %vm380, %v928, 0
      %v972 = vsel %vm380, %v929, 0
      %v975 = vsel %vm380, %v930, 0
      %v978 = vsel %vm380, %v931, 0
      %v981 = vsel %vm380, %v932, 0
      %v984 = vsel %vm429, %v934, 0
      %986 = vmatpush.bf16.msra.mxu0 0
      %987 = vmatpush.bf16.msra.mxu0 0
      %988 = vmatpush.bf16.msra.mxu0 0
      %989 = vmatpush.bf16.msra.mxu0 0
      %990 = vmatpush.bf16.msra.mxu0 0
      %991 = vmatpush.bf16.msra.mxu0 0
      %992 = vmatpush.bf16.msra.mxu0 0
      %993 = vmatpush.bf16.msra.mxu0 %v984
      %994 = vmatmul.bf16.gmra.mxu0 %v936
      %v995 = vpop.f32.mrf.mxu0
      %v996 = vadd.f32 0.0, %v995
      %v997 = vpop.f32.mrf.mxu0
      %v998 = vadd.f32 0.0, %v997
      %999 = vmatmul.bf16.gmra.mxu0 %v939
      %v1000 = vpop.f32.mrf.mxu0
      %v1001 = vadd.f32 0.0, %v1000
      %v1002 = vpop.f32.mrf.mxu0
      %v1003 = vadd.f32 0.0, %v1002
      %1004 = vmatmul.bf16.gmra.mxu0 %v942
      %v1005 = vpop.f32.mrf.mxu0
      %v1006 = vadd.f32 0.0, %v1005
      %v1007 = vpop.f32.mrf.mxu0
      %v1008 = vadd.f32 0.0, %v1007
      %1009 = vmatmul.bf16.gmra.mxu0 %v945
      %v1010 = vpop.f32.mrf.mxu0
      %v1011 = vadd.f32 0.0, %v1010
      %v1012 = vpop.f32.mrf.mxu0
      %v1013 = vadd.f32 0.0, %v1012
      %1014 = vmatmul.bf16.gmra.mxu0 %v948
      %v1015 = vpop.f32.mrf.mxu0
      %v1016 = vadd.f32 0.0, %v1015
      %v1017 = vpop.f32.mrf.mxu0
      %v1018 = vadd.f32 0.0, %v1017
      %1019 = vmatmul.bf16.gmra.mxu0 %v951
      %v1020 = vpop.f32.mrf.mxu0
      %v1021 = vadd.f32 0.0, %v1020
      %v1022 = vpop.f32.mrf.mxu0
      %v1023 = vadd.f32 0.0, %v1022
      %1024 = vmatmul.bf16.gmra.mxu0 %v954
      %v1025 = vpop.f32.mrf.mxu0
      %v1026 = vadd.f32 0.0, %v1025
      %v1027 = vpop.f32.mrf.mxu0
      %v1028 = vadd.f32 0.0, %v1027
      %1029 = vmatmul.bf16.gmra.mxu0 %v957
      %v1030 = vpop.f32.mrf.mxu0
      %v1031 = vadd.f32 0.0, %v1030
      %v1032 = vpop.f32.mrf.mxu0
      %v1033 = vadd.f32 0.0, %v1032
      %1034 = vmatmul.bf16.gmra.mxu0 %v960
      %v1035 = vpop.f32.mrf.mxu0
      %v1036 = vadd.f32 0.0, %v1035
      %v1037 = vpop.f32.mrf.mxu0
      %v1038 = vadd.f32 0.0, %v1037
      %1039 = vmatmul.bf16.gmra.mxu0 %v963
      %v1040 = vpop.f32.mrf.mxu0
      %v1041 = vadd.f32 0.0, %v1040
      %v1042 = vpop.f32.mrf.mxu0
      %v1043 = vadd.f32 0.0, %v1042
      %1044 = vmatmul.bf16.gmra.mxu0 %v966
      %v1045 = vpop.f32.mrf.mxu0
      %v1046 = vadd.f32 0.0, %v1045
      %v1047 = vpop.f32.mrf.mxu0
      %v1048 = vadd.f32 0.0, %v1047
      %1049 = vmatmul.bf16.gmra.mxu0 %v969
      %v1050 = vpop.f32.mrf.mxu0
      %v1051 = vadd.f32 0.0, %v1050
      %v1052 = vpop.f32.mrf.mxu0
      %v1053 = vadd.f32 0.0, %v1052
      %1054 = vmatmul.bf16.gmra.mxu0 %v972
      %v1055 = vpop.f32.mrf.mxu0
      %v1056 = vadd.f32 0.0, %v1055
      %v1057 = vpop.f32.mrf.mxu0
      %v1058 = vadd.f32 0.0, %v1057
      %1059 = vmatmul.bf16.gmra.mxu0 %v975
      %v1060 = vpop.f32.mrf.mxu0
      %v1061 = vadd.f32 0.0, %v1060
      %v1062 = vpop.f32.mrf.mxu0
      %v1063 = vadd.f32 0.0, %v1062
      %1064 = vmatmul.bf16.gmra.mxu0 %v978
      %v1065 = vpop.f32.mrf.mxu0
      %v1066 = vadd.f32 0.0, %v1065
      %v1067 = vpop.f32.mrf.mxu0
      %v1068 = vadd.f32 0.0, %v1067
      %1069 = vmatmul.bf16.gmra.mxu0 %v981
      %v1070 = vpop.f32.mrf.mxu0
      %v1071 = vadd.f32 0.0, %v1070
      %v1072 = vpop.f32.mrf.mxu0
      %v1073 = vadd.f32 0.0, %v1072
      %1074 = vdwg.mxu0
      %v1075 = vadd.f32 %v852, %v996
      %v1076 = vadd.f32 %v853, %v998
      %v1077 = vadd.f32 %v854, %v1001
      %v1078 = vadd.f32 %v855, %v1003
      %v1079 = vadd.f32 %v856, %v1006
      %v1080 = vadd.f32 %v857, %v1008
      %v1081 = vadd.f32 %v858, %v1011
      %v1082 = vadd.f32 %v859, %v1013
      %v1083 = vadd.f32 %v860, %v1016
      %v1084 = vadd.f32 %v861, %v1018
      %v1085 = vadd.f32 %v862, %v1021
      %v1086 = vadd.f32 %v863, %v1023
      %v1087 = vadd.f32 %v864, %v1026
      %v1088 = vadd.f32 %v865, %v1028
      %v1089 = vadd.f32 %v866, %v1031
      %v1090 = vadd.f32 %v867, %v1033
      %v1091 = vadd.f32 %v868, %v1036
      %v1092 = vadd.f32 %v869, %v1038
      %v1093 = vadd.f32 %v870, %v1041
      %v1094 = vadd.f32 %v871, %v1043
      %v1095 = vadd.f32 %v872, %v1046
      %v1096 = vadd.f32 %v873, %v1048
      %v1097 = vadd.f32 %v874, %v1051
      %v1098 = vadd.f32 %v875, %v1053
      %v1099 = vadd.f32 %v876, %v1056
      %v1100 = vadd.f32 %v877, %v1058
      %v1101 = vadd.f32 %v878, %v1061
      %v1102 = vadd.f32 %v879, %v1063
      %v1103 = vadd.f32 %v880, %v1066
      %v1104 = vadd.f32 %v881, %v1068
      %v1105 = vadd.f32 %v882, %v1071
      %v1106 = vadd.f32 %v883, %v1073
      %v1107 = vld [vmem:[%s884 + $0x1] sm:$0xff]
      %v1108 = vld [vmem:[%s884 + $0x9] sm:$0xff]
      %v1109 = vld [vmem:[%s884 + $0x19] sm:$0xff]
      %v1110 = vld [vmem:[%s884 + $0x21] sm:$0xff]
      %v1111 = vld [vmem:[%s884 + $0x31] sm:$0xff]
      %v1112 = vld [vmem:[%s884 + $0x39] sm:$0xff]
      %v1113 = vld [vmem:[%s884 + $0x49] sm:$0xff]
      %v1114 = vld [vmem:[%s884 + $0x51] sm:$0xff]
      %v1115 = vld [vmem:[%s884 + $0x61] sm:$0xff]
      %v1116 = vld [vmem:[%s884 + $0x69] sm:$0xff]
      %v1117 = vld [vmem:[%s884 + $0x79] sm:$0xff]
      %v1118 = vld [vmem:[%s884 + $0x81] sm:$0xff]
      %v1119 = vld [vmem:[%s884 + $0x91] sm:$0xff]
      %v1120 = vld [vmem:[%s884 + $0x99] sm:$0xff]
      %v1121 = vld [vmem:[%s884 + $0xa9] sm:$0xff]
      %v1122 = vld [vmem:[%s884 + $0xb1] sm:$0xff]
      %v1123 = vld [vmem:[%s884 + $0xc1] sm:$0xff]
      %v1124 = vld [vmem:[%s884 + $0xc9] sm:$0xff]
      %v1125 = vld [vmem:[%s884 + $0xd9] sm:$0xff]
      %v1126 = vld [vmem:[%s884 + $0xe1] sm:$0xff]
      %v1127 = vld [vmem:[%s884 + $0xf1] sm:$0xff]
      %v1128 = vld [vmem:[%s884 + $0xf9] sm:$0xff]
      %v1129 = vld [vmem:[%s884 + $0x109] sm:$0xff]
      %v1130 = vld [vmem:[%s884 + $0x111] sm:$0xff]
      %v1131 = vld [vmem:[%s884 + $0x121] sm:$0xff]
      %v1132 = vld [vmem:[%s884 + $0x129] sm:$0xff]
      %v1133 = vld [vmem:[%s884 + $0x139] sm:$0xff]
      %v1134 = vld [vmem:[%s884 + $0x141] sm:$0xff]
      %v1135 = vld [vmem:[%s884 + $0x151] sm:$0xff]
      %v1136 = vld [vmem:[%s884 + $0x159] sm:$0xff]
      %v1137 = vld [vmem:[%s884 + $0x169] sm:$0xff]
      %v1138 = vld [vmem:[%s884 + $0x171] sm:$0xff]
      %v1139 = vpack.c.bf16 %v1108, %v1107
      %v1140 = vpack.c.bf16 %v1110, %v1109
      %v1141 = vpack.c.bf16 %v1112, %v1111
      %v1142 = vpack.c.bf16 %v1114, %v1113
      %v1143 = vpack.c.bf16 %v1116, %v1115
      %v1144 = vpack.c.bf16 %v1118, %v1117
      %v1145 = vpack.c.bf16 %v1120, %v1119
      %v1146 = vpack.c.bf16 %v1122, %v1121
      %v1147 = vpack.c.bf16 %v1124, %v1123
      %v1148 = vpack.c.bf16 %v1126, %v1125
      %v1149 = vpack.c.bf16 %v1128, %v1127
      %v1150 = vpack.c.bf16 %v1130, %v1129
      %v1151 = vpack.c.bf16 %v1132, %v1131
      %v1152 = vpack.c.bf16 %v1134, %v1133
      %v1153 = vpack.c.bf16 %v1136, %v1135
      %v1154 = vpack.c.bf16 %v1138, %v1137
      %s1155 = scalar_lea.vmem %s1, 8
      %v1156 = vld [vmem:[%s1155] sm:$0x3]
      %v1158 = vsel %vm380, %v1139, 0
      %v1161 = vsel %vm380, %v1140, 0
      %v1164 = vsel %vm380, %v1141, 0
      %v1167 = vsel %vm380, %v1142, 0
      %v1170 = vsel %vm380, %v1143, 0
      %v1173 = vsel %vm380, %v1144, 0
      %v1176 = vsel %vm380, %v1145, 0
      %v1179 = vsel %vm380, %v1146, 0
      %v1182 = vsel %vm380, %v1147, 0
      %v1185 = vsel %vm380, %v1148, 0
      %v1188 = vsel %vm380, %v1149, 0
      %v1191 = vsel %vm380, %v1150, 0
      %v1194 = vsel %vm380, %v1151, 0
      %v1197 = vsel %vm380, %v1152, 0
      %v1200 = vsel %vm380, %v1153, 0
      %v1203 = vsel %vm380, %v1154, 0
      %v1206 = vsel %vm429, %v1156, 0
      %1208 = vmatpush.bf16.msra.mxu0 0
      %1209 = vmatpush.bf16.msra.mxu0 0
      %1210 = vmatpush.bf16.msra.mxu0 0
      %1211 = vmatpush.bf16.msra.mxu0 0
      %1212 = vmatpush.bf16.msra.mxu0 0
      %1213 = vmatpush.bf16.msra.mxu0 0
      %1214 = vmatpush.bf16.msra.mxu0 0
      %1215 = vmatpush.bf16.msra.mxu0 %v1206
      %1216 = vmatmul.bf16.gmra.mxu0 %v1158
      %v1217 = vpop.f32.mrf.mxu0
      %v1218 = vadd.f32 0.0, %v1217
      %v1219 = vpop.f32.mrf.mxu0
      %v1220 = vadd.f32 0.0, %v1219
      %1221 = vmatmul.bf16.gmra.mxu0 %v1161
      %v1222 = vpop.f32.mrf.mxu0
      %v1223 = vadd.f32 0.0, %v1222
      %v1224 = vpop.f32.mrf.mxu0
      %v1225 = vadd.f32 0.0, %v1224
      %1226 = vmatmul.bf16.gmra.mxu0 %v1164
      %v1227 = vpop.f32.mrf.mxu0
      %v1228 = vadd.f32 0.0, %v1227
      %v1229 = vpop.f32.mrf.mxu0
      %v1230 = vadd.f32 0.0, %v1229
      %1231 = vmatmul.bf16.gmra.mxu0 %v1167
      %v1232 = vpop.f32.mrf.mxu0
      %v1233 = vadd.f32 0.0, %v1232
      %v1234 = vpop.f32.mrf.mxu0
      %v1235 = vadd.f32 0.0, %v1234
      %1236 = vmatmul.bf16.gmra.mxu0 %v1170
      %v1237 = vpop.f32.mrf.mxu0
      %v1238 = vadd.f32 0.0, %v1237
      %v1239 = vpop.f32.mrf.mxu0
      %v1240 = vadd.f32 0.0, %v1239
      %1241 = vmatmul.bf16.gmra.mxu0 %v1173
      %v1242 = vpop.f32.mrf.mxu0
      %v1243 = vadd.f32 0.0, %v1242
      %v1244 = vpop.f32.mrf.mxu0
      %v1245 = vadd.f32 0.0, %v1244
      %1246 = vmatmul.bf16.gmra.mxu0 %v1176
      %v1247 = vpop.f32.mrf.mxu0
      %v1248 = vadd.f32 0.0, %v1247
      %v1249 = vpop.f32.mrf.mxu0
      %v1250 = vadd.f32 0.0, %v1249
      %1251 = vmatmul.bf16.gmra.mxu0 %v1179
      %v1252 = vpop.f32.mrf.mxu0
      %v1253 = vadd.f32 0.0, %v1252
      %v1254 = vpop.f32.mrf.mxu0
      %v1255 = vadd.f32 0.0, %v1254
      %1256 = vmatmul.bf16.gmra.mxu0 %v1182
      %v1257 = vpop.f32.mrf.mxu0
      %v1258 = vadd.f32 0.0, %v1257
      %v1259 = vpop.f32.mrf.mxu0
      %v1260 = vadd.f32 0.0, %v1259
      %1261 = vmatmul.bf16.gmra.mxu0 %v1185
      %v1262 = vpop.f32.mrf.mxu0
      %v1263 = vadd.f32 0.0, %v1262
      %v1264 = vpop.f32.mrf.mxu0
      %v1265 = vadd.f32 0.0, %v1264
      %1266 = vmatmul.bf16.gmra.mxu0 %v1188
      %v1267 = vpop.f32.mrf.mxu0
      %v1268 = vadd.f32 0.0, %v1267
      %v1269 = vpop.f32.mrf.mxu0
      %v1270 = vadd.f32 0.0, %v1269
      %1271 = vmatmul.bf16.gmra.mxu0 %v1191
      %v1272 = vpop.f32.mrf.mxu0
      %v1273 = vadd.f32 0.0, %v1272
      %v1274 = vpop.f32.mrf.mxu0
      %v1275 = vadd.f32 0.0, %v1274
      %1276 = vmatmul.bf16.gmra.mxu0 %v1194
      %v1277 = vpop.f32.mrf.mxu0
      %v1278 = vadd.f32 0.0, %v1277
      %v1279 = vpop.f32.mrf.mxu0
      %v1280 = vadd.f32 0.0, %v1279
      %1281 = vmatmul.bf16.gmra.mxu0 %v1197
      %v1282 = vpop.f32.mrf.mxu0
      %v1283 = vadd.f32 0.0, %v1282
      %v1284 = vpop.f32.mrf.mxu0
      %v1285 = vadd.f32 0.0, %v1284
      %1286 = vmatmul.bf16.gmra.mxu0 %v1200
      %v1287 = vpop.f32.mrf.mxu0
      %v1288 = vadd.f32 0.0, %v1287
      %v1289 = vpop.f32.mrf.mxu0
      %v1290 = vadd.f32 0.0, %v1289
      %1291 = vmatmul.bf16.gmra.mxu0 %v1203
      %v1292 = vpop.f32.mrf.mxu0
      %v1293 = vadd.f32 0.0, %v1292
      %v1294 = vpop.f32.mrf.mxu0
      %v1295 = vadd.f32 0.0, %v1294
      %1296 = vdwg.mxu0
      %v1297 = vadd.f32 %v1075, %v1218
      %v1298 = vadd.f32 %v1076, %v1220
      %v1299 = vadd.f32 %v1077, %v1223
      %v1300 = vadd.f32 %v1078, %v1225
      %v1301 = vadd.f32 %v1079, %v1228
      %v1302 = vadd.f32 %v1080, %v1230
      %v1303 = vadd.f32 %v1081, %v1233
      %v1304 = vadd.f32 %v1082, %v1235
      %v1305 = vadd.f32 %v1083, %v1238
      %v1306 = vadd.f32 %v1084, %v1240
      %v1307 = vadd.f32 %v1085, %v1243
      %v1308 = vadd.f32 %v1086, %v1245
      %v1309 = vadd.f32 %v1087, %v1248
      %v1310 = vadd.f32 %v1088, %v1250
      %v1311 = vadd.f32 %v1089, %v1253
      %v1312 = vadd.f32 %v1090, %v1255
      %v1313 = vadd.f32 %v1091, %v1258
      %v1314 = vadd.f32 %v1092, %v1260
      %v1315 = vadd.f32 %v1093, %v1263
      %v1316 = vadd.f32 %v1094, %v1265
      %v1317 = vadd.f32 %v1095, %v1268
      %v1318 = vadd.f32 %v1096, %v1270
      %v1319 = vadd.f32 %v1097, %v1273
      %v1320 = vadd.f32 %v1098, %v1275
      %v1321 = vadd.f32 %v1099, %v1278
      %v1322 = vadd.f32 %v1100, %v1280
      %v1323 = vadd.f32 %v1101, %v1283
      %v1324 = vadd.f32 %v1102, %v1285
      %v1325 = vadd.f32 %v1103, %v1288
      %v1326 = vadd.f32 %v1104, %v1290
      %v1327 = vadd.f32 %v1105, %v1293
      %v1328 = vadd.f32 %v1106, %v1295
      %v1329 = vld [vmem:[%s884 + $0x2] sm:$0xff]
      %v1330 = vld [vmem:[%s884 + $0xa] sm:$0xff]
      %v1331 = vld [vmem:[%s884 + $0x1a] sm:$0xff]
      %v1332 = vld [vmem:[%s884 + $0x22] sm:$0xff]
      %v1333 = vld [vmem:[%s884 + $0x32] sm:$0xff]
      %v1334 = vld [vmem:[%s884 + $0x3a] sm:$0xff]
      %v1335 = vld [vmem:[%s884 + $0x4a] sm:$0xff]
      %v1336 = vld [vmem:[%s884 + $0x52] sm:$0xff]
      %v1337 = vld [vmem:[%s884 + $0x62] sm:$0xff]
      %v1338 = vld [vmem:[%s884 + $0x6a] sm:$0xff]
      %v1339 = vld [vmem:[%s884 + $0x7a] sm:$0xff]
      %v1340 = vld [vmem:[%s884 + $0x82] sm:$0xff]
      %v1341 = vld [vmem:[%s884 + $0x92] sm:$0xff]
      %v1342 = vld [vmem:[%s884 + $0x9a] sm:$0xff]
      %v1343 = vld [vmem:[%s884 + $0xaa] sm:$0xff]
      %v1344 = vld [vmem:[%s884 + $0xb2] sm:$0xff]
      %v1345 = vld [vmem:[%s884 + $0xc2] sm:$0xff]
      %v1346 = vld [vmem:[%s884 + $0xca] sm:$0xff]
      %v1347 = vld [vmem:[%s884 + $0xda] sm:$0xff]
      %v1348 = vld [vmem:[%s884 + $0xe2] sm:$0xff]
      %v1349 = vld [vmem:[%s884 + $0xf2] sm:$0xff]
      %v1350 = vld [vmem:[%s884 + $0xfa] sm:$0xff]
      %v1351 = vld [vmem:[%s884 + $0x10a] sm:$0xff]
      %v1352 = vld [vmem:[%s884 + $0x112] sm:$0xff]
      %v1353 = vld [vmem:[%s884 + $0x122] sm:$0xff]
      %v1354 = vld [vmem:[%s884 + $0x12a] sm:$0xff]
      %v1355 = vld [vmem:[%s884 + $0x13a] sm:$0xff]
      %v1356 = vld [vmem:[%s884 + $0x142] sm:$0xff]
      %v1357 = vld [vmem:[%s884 + $0x152] sm:$0xff]
      %v1358 = vld [vmem:[%s884 + $0x15a] sm:$0xff]
      %v1359 = vld [vmem:[%s884 + $0x16a] sm:$0xff]
      %v1360 = vld [vmem:[%s884 + $0x172] sm:$0xff]
      %v1361 = vpack.c.bf16 %v1330, %v1329
      %v1362 = vpack.c.bf16 %v1332, %v1331
      %v1363 = vpack.c.bf16 %v1334, %v1333
      %v1364 = vpack.c.bf16 %v1336, %v1335
      %v1365 = vpack.c.bf16 %v1338, %v1337
      %v1366 = vpack.c.bf16 %v1340, %v1339
      %v1367 = vpack.c.bf16 %v1342, %v1341
      %v1368 = vpack.c.bf16 %v1344, %v1343
      %v1369 = vpack.c.bf16 %v1346, %v1345
      %v1370 = vpack.c.bf16 %v1348, %v1347
      %v1371 = vpack.c.bf16 %v1350, %v1349
      %v1372 = vpack.c.bf16 %v1352, %v1351
      %v1373 = vpack.c.bf16 %v1354, %v1353
      %v1374 = vpack.c.bf16 %v1356, %v1355
      %v1375 = vpack.c.bf16 %v1358, %v1357
      %v1376 = vpack.c.bf16 %v1360, %v1359
      %s1377 = scalar_lea.vmem %s1, 10
      %v1378 = vld [vmem:[%s1377] sm:$0x3]
      %v1380 = vsel %vm380, %v1361, 0
      %v1383 = vsel %vm380, %v1362, 0
      %v1386 = vsel %vm380, %v1363, 0
      %v1389 = vsel %vm380, %v1364, 0
      %v1392 = vsel %vm380, %v1365, 0
      %v1395 = vsel %vm380, %v1366, 0
      %v1398 = vsel %vm380, %v1367, 0
      %v1401 = vsel %vm380, %v1368, 0
      %v1404 = vsel %vm380, %v1369, 0
      %v1407 = vsel %vm380, %v1370, 0
      %v1410 = vsel %vm380, %v1371, 0
      %v1413 = vsel %vm380, %v1372, 0
      %v1416 = vsel %vm380, %v1373, 0
      %v1419 = vsel %vm380, %v1374, 0
      %v1422 = vsel %vm380, %v1375, 0
      %v1425 = vsel %vm380, %v1376, 0
      %v1428 = vsel %vm429, %v1378, 0
      %1430 = vmatpush.bf16.msra.mxu0 0
      %1431 = vmatpush.bf16.msra.mxu0 0
      %1432 = vmatpush.bf16.msra.mxu0 0
      %1433 = vmatpush.bf16.msra.mxu0 0
      %1434 = vmatpush.bf16.msra.mxu0 0
      %1435 = vmatpush.bf16.msra.mxu0 0
      %1436 = vmatpush.bf16.msra.mxu0 0
      %1437 = vmatpush.bf16.msra.mxu0 %v1428
      %1438 = vmatmul.bf16.gmra.mxu0 %v1380
      %v1439 = vpop.f32.mrf.mxu0
      %v1440 = vadd.f32 0.0, %v1439
      %v1441 = vpop.f32.mrf.mxu0
      %v1442 = vadd.f32 0.0, %v1441
      %1443 = vmatmul.bf16.gmra.mxu0 %v1383
      %v1444 = vpop.f32.mrf.mxu0
      %v1445 = vadd.f32 0.0, %v1444
      %v1446 = vpop.f32.mrf.mxu0
      %v1447 = vadd.f32 0.0, %v1446
      %1448 = vmatmul.bf16.gmra.mxu0 %v1386
      %v1449 = vpop.f32.mrf.mxu0
      %v1450 = vadd.f32 0.0, %v1449
      %v1451 = vpop.f32.mrf.mxu0
      %v1452 = vadd.f32 0.0, %v1451
      %1453 = vmatmul.bf16.gmra.mxu0 %v1389
      %v1454 = vpop.f32.mrf.mxu0
      %v1455 = vadd.f32 0.0, %v1454
      %v1456 = vpop.f32.mrf.mxu0
      %v1457 = vadd.f32 0.0, %v1456
      %1458 = vmatmul.bf16.gmra.mxu0 %v1392
      %v1459 = vpop.f32.mrf.mxu0
      %v1460 = vadd.f32 0.0, %v1459
      %v1461 = vpop.f32.mrf.mxu0
      %v1462 = vadd.f32 0.0, %v1461
      %1463 = vmatmul.bf16.gmra.mxu0 %v1395
      %v1464 = vpop.f32.mrf.mxu0
      %v1465 = vadd.f32 0.0, %v1464
      %v1466 = vpop.f32.mrf.mxu0
      %v1467 = vadd.f32 0.0, %v1466
      %1468 = vmatmul.bf16.gmra.mxu0 %v1398
      %v1469 = vpop.f32.mrf.mxu0
      %v1470 = vadd.f32 0.0, %v1469
      %v1471 = vpop.f32.mrf.mxu0
      %v1472 = vadd.f32 0.0, %v1471
      %1473 = vmatmul.bf16.gmra.mxu0 %v1401
      %v1474 = vpop.f32.mrf.mxu0
      %v1475 = vadd.f32 0.0, %v1474
      %v1476 = vpop.f32.mrf.mxu0
      %v1477 = vadd.f32 0.0, %v1476
      %1478 = vmatmul.bf16.gmra.mxu0 %v1404
      %v1479 = vpop.f32.mrf.mxu0
      %v1480 = vadd.f32 0.0, %v1479
      %v1481 = vpop.f32.mrf.mxu0
      %v1482 = vadd.f32 0.0, %v1481
      %1483 = vmatmul.bf16.gmra.mxu0 %v1407
      %v1484 = vpop.f32.mrf.mxu0
      %v1485 = vadd.f32 0.0, %v1484
      %v1486 = vpop.f32.mrf.mxu0
      %v1487 = vadd.f32 0.0, %v1486
      %1488 = vmatmul.bf16.gmra.mxu0 %v1410
      %v1489 = vpop.f32.mrf.mxu0
      %v1490 = vadd.f32 0.0, %v1489
      %v1491 = vpop.f32.mrf.mxu0
      %v1492 = vadd.f32 0.0, %v1491
      %1493 = vmatmul.bf16.gmra.mxu0 %v1413
      %v1494 = vpop.f32.mrf.mxu0
      %v1495 = vadd.f32 0.0, %v1494
      %v1496 = vpop.f32.mrf.mxu0
      %v1497 = vadd.f32 0.0, %v1496
      %1498 = vmatmul.bf16.gmra.mxu0 %v1416
      %v1499 = vpop.f32.mrf.mxu0
      %v1500 = vadd.f32 0.0, %v1499
      %v1501 = vpop.f32.mrf.mxu0
      %v1502 = vadd.f32 0.0, %v1501
      %1503 = vmatmul.bf16.gmra.mxu0 %v1419
      %v1504 = vpop.f32.mrf.mxu0
      %v1505 = vadd.f32 0.0, %v1504
      %v1506 = vpop.f32.mrf.mxu0
      %v1507 = vadd.f32 0.0, %v1506
      %1508 = vmatmul.bf16.gmra.mxu0 %v1422
      %v1509 = vpop.f32.mrf.mxu0
      %v1510 = vadd.f32 0.0, %v1509
      %v1511 = vpop.f32.mrf.mxu0
      %v1512 = vadd.f32 0.0, %v1511
      %1513 = vmatmul.bf16.gmra.mxu0 %v1425
      %v1514 = vpop.f32.mrf.mxu0
      %v1515 = vadd.f32 0.0, %v1514
      %v1516 = vpop.f32.mrf.mxu0
      %v1517 = vadd.f32 0.0, %v1516
      %1518 = vdwg.mxu0
      %v1519 = vadd.f32 %v1297, %v1440
      %v1520 = vadd.f32 %v1298, %v1442
      %v1521 = vadd.f32 %v1299, %v1445
      %v1522 = vadd.f32 %v1300, %v1447
      %v1523 = vadd.f32 %v1301, %v1450
      %v1524 = vadd.f32 %v1302, %v1452
      %v1525 = vadd.f32 %v1303, %v1455
      %v1526 = vadd.f32 %v1304, %v1457
      %v1527 = vadd.f32 %v1305, %v1460
      %v1528 = vadd.f32 %v1306, %v1462
      %v1529 = vadd.f32 %v1307, %v1465
      %v1530 = vadd.f32 %v1308, %v1467
      %v1531 = vadd.f32 %v1309, %v1470
      %v1532 = vadd.f32 %v1310, %v1472
      %v1533 = vadd.f32 %v1311, %v1475
      %v1534 = vadd.f32 %v1312, %v1477
      %v1535 = vadd.f32 %v1313, %v1480
      %v1536 = vadd.f32 %v1314, %v1482
      %v1537 = vadd.f32 %v1315, %v1485
      %v1538 = vadd.f32 %v1316, %v1487
      %v1539 = vadd.f32 %v1317, %v1490
      %v1540 = vadd.f32 %v1318, %v1492
      %v1541 = vadd.f32 %v1319, %v1495
      %v1542 = vadd.f32 %v1320, %v1497
      %v1543 = vadd.f32 %v1321, %v1500
      %v1544 = vadd.f32 %v1322, %v1502
      %v1545 = vadd.f32 %v1323, %v1505
      %v1546 = vadd.f32 %v1324, %v1507
      %v1547 = vadd.f32 %v1325, %v1510
      %v1548 = vadd.f32 %v1326, %v1512
      %v1549 = vadd.f32 %v1327, %v1515
      %v1550 = vadd.f32 %v1328, %v1517
      %s1551 = scalar_lea.vmem %s273, 48
      %v1552 = vld [vmem:[%s1551] sm:$0xff]
      %v1553 = vld [vmem:[%s1551 + $0x8] sm:$0xff]
      %v1554 = vld [vmem:[%s1551 + $0x18] sm:$0xff]
      %v1555 = vld [vmem:[%s1551 + $0x20] sm:$0xff]
      %v1556 = vld [vmem:[%s1551 + $0x30] sm:$0xff]
      %v1557 = vld [vmem:[%s1551 + $0x38] sm:$0xff]
      %v1558 = vld [vmem:[%s1551 + $0x48] sm:$0xff]
      %v1559 = vld [vmem:[%s1551 + $0x50] sm:$0xff]
      %v1560 = vld [vmem:[%s1551 + $0x60] sm:$0xff]
      %v1561 = vld [vmem:[%s1551 + $0x68] sm:$0xff]
      %v1562 = vld [vmem:[%s1551 + $0x78] sm:$0xff]
      %v1563 = vld [vmem:[%s1551 + $0x80] sm:$0xff]
      %v1564 = vld [vmem:[%s1551 + $0x90] sm:$0xff]
      %v1565 = vld [vmem:[%s1551 + $0x98] sm:$0xff]
      %v1566 = vld [vmem:[%s1551 + $0xa8] sm:$0xff]
      %v1567 = vld [vmem:[%s1551 + $0xb0] sm:$0xff]
      %v1568 = vld [vmem:[%s1551 + $0xc0] sm:$0xff]
      %v1569 = vld [vmem:[%s1551 + $0xc8] sm:$0xff]
      %v1570 = vld [vmem:[%s1551 + $0xd8] sm:$0xff]
      %v1571 = vld [vmem:[%s1551 + $0xe0] sm:$0xff]
      %v1572 = vld [vmem:[%s1551 + $0xf0] sm:$0xff]
      %v1573 = vld [vmem:[%s1551 + $0xf8] sm:$0xff]
      %v1574 = vld [vmem:[%s1551 + $0x108] sm:$0xff]
      %v1575 = vld [vmem:[%s1551 + $0x110] sm:$0xff]
      %v1576 = vld [vmem:[%s1551 + $0x120] sm:$0xff]
      %v1577 = vld [vmem:[%s1551 + $0x128] sm:$0xff]
      %v1578 = vld [vmem:[%s1551 + $0x138] sm:$0xff]
      %v1579 = vld [vmem:[%s1551 + $0x140] sm:$0xff]
      %v1580 = vld [vmem:[%s1551 + $0x150] sm:$0xff]
      %v1581 = vld [vmem:[%s1551 + $0x158] sm:$0xff]
      %v1582 = vld [vmem:[%s1551 + $0x168] sm:$0xff]
      %v1583 = vld [vmem:[%s1551 + $0x170] sm:$0xff]
      %v1584 = vpack.c.bf16 %v1553, %v1552
      %v1585 = vpack.c.bf16 %v1555, %v1554
      %v1586 = vpack.c.bf16 %v1557, %v1556
      %v1587 = vpack.c.bf16 %v1559, %v1558
      %v1588 = vpack.c.bf16 %v1561, %v1560
      %v1589 = vpack.c.bf16 %v1563, %v1562
      %v1590 = vpack.c.bf16 %v1565, %v1564
      %v1591 = vpack.c.bf16 %v1567, %v1566
      %v1592 = vpack.c.bf16 %v1569, %v1568
      %v1593 = vpack.c.bf16 %v1571, %v1570
      %v1594 = vpack.c.bf16 %v1573, %v1572
      %v1595 = vpack.c.bf16 %v1575, %v1574
      %v1596 = vpack.c.bf16 %v1577, %v1576
      %v1597 = vpack.c.bf16 %v1579, %v1578
      %v1598 = vpack.c.bf16 %v1581, %v1580
      %v1599 = vpack.c.bf16 %v1583, %v1582
      %s1600 = scalar_lea.vmem %s1, 12
      %v1601 = vld [vmem:[%s1600] sm:$0x3]
      %v1603 = vsel %vm380, %v1584, 0
      %v1606 = vsel %vm380, %v1585, 0
      %v1609 = vsel %vm380, %v1586, 0
      %v1612 = vsel %vm380, %v1587, 0
      %v1615 = vsel %vm380, %v1588, 0
      %v1618 = vsel %vm380, %v1589, 0
      %v1621 = vsel %vm380, %v1590, 0
      %v1624 = vsel %vm380, %v1591, 0
      %v1627 = vsel %vm380, %v1592, 0
      %v1630 = vsel %vm380, %v1593, 0
      %v1633 = vsel %vm380, %v1594, 0
      %v1636 = vsel %vm380, %v1595, 0
      %v1639 = vsel %vm380, %v1596, 0
      %v1642 = vsel %vm380, %v1597, 0
      %v1645 = vsel %vm380, %v1598, 0
      %v1648 = vsel %vm380, %v1599, 0
      %v1651 = vsel %vm429, %v1601, 0
      %1653 = vmatpush.bf16.msra.mxu0 0
      %1654 = vmatpush.bf16.msra.mxu0 0
      %1655 = vmatpush.bf16.msra.mxu0 0
      %1656 = vmatpush.bf16.msra.mxu0 0
      %1657 = vmatpush.bf16.msra.mxu0 0
      %1658 = vmatpush.bf16.msra.mxu0 0
      %1659 = vmatpush.bf16.msra.mxu0 0
      %1660 = vmatpush.bf16.msra.mxu0 %v1651
      %1661 = vmatmul.bf16.gmra.mxu0 %v1603
      %v1662 = vpop.f32.mrf.mxu0
      %v1663 = vadd.f32 0.0, %v1662
      %v1664 = vpop.f32.mrf.mxu0
      %v1665 = vadd.f32 0.0, %v1664
      %1666 = vmatmul.bf16.gmra.mxu0 %v1606
      %v1667 = vpop.f32.mrf.mxu0
      %v1668 = vadd.f32 0.0, %v1667
      %v1669 = vpop.f32.mrf.mxu0
      %v1670 = vadd.f32 0.0, %v1669
      %1671 = vmatmul.bf16.gmra.mxu0 %v1609
      %v1672 = vpop.f32.mrf.mxu0
      %v1673 = vadd.f32 0.0, %v1672
      %v1674 = vpop.f32.mrf.mxu0
      %v1675 = vadd.f32 0.0, %v1674
      %1676 = vmatmul.bf16.gmra.mxu0 %v1612
      %v1677 = vpop.f32.mrf.mxu0
      %v1678 = vadd.f32 0.0, %v1677
      %v1679 = vpop.f32.mrf.mxu0
      %v1680 = vadd.f32 0.0, %v1679
      %1681 = vmatmul.bf16.gmra.mxu0 %v1615
      %v1682 = vpop.f32.mrf.mxu0
      %v1683 = vadd.f32 0.0, %v1682
      %v1684 = vpop.f32.mrf.mxu0
      %v1685 = vadd.f32 0.0, %v1684
      %1686 = vmatmul.bf16.gmra.mxu0 %v1618
      %v1687 = vpop.f32.mrf.mxu0
      %v1688 = vadd.f32 0.0, %v1687
      %v1689 = vpop.f32.mrf.mxu0
      %v1690 = vadd.f32 0.0, %v1689
      %1691 = vmatmul.bf16.gmra.mxu0 %v1621
      %v1692 = vpop.f32.mrf.mxu0
      %v1693 = vadd.f32 0.0, %v1692
      %v1694 = vpop.f32.mrf.mxu0
      %v1695 = vadd.f32 0.0, %v1694
      %1696 = vmatmul.bf16.gmra.mxu0 %v1624
      %v1697 = vpop.f32.mrf.mxu0
      %v1698 = vadd.f32 0.0, %v1697
      %v1699 = vpop.f32.mrf.mxu0
      %v1700 = vadd.f32 0.0, %v1699
      %1701 = vmatmul.bf16.gmra.mxu0 %v1627
      %v1702 = vpop.f32.mrf.mxu0
      %v1703 = vadd.f32 0.0, %v1702
      %v1704 = vpop.f32.mrf.mxu0
      %v1705 = vadd.f32 0.0, %v1704
      %1706 = vmatmul.bf16.gmra.mxu0 %v1630
      %v1707 = vpop.f32.mrf.mxu0
      %v1708 = vadd.f32 0.0, %v1707
      %v1709 = vpop.f32.mrf.mxu0
      %v1710 = vadd.f32 0.0, %v1709
      %1711 = vmatmul.bf16.gmra.mxu0 %v1633
      %v1712 = vpop.f32.mrf.mxu0
      %v1713 = vadd.f32 0.0, %v1712
      %v1714 = vpop.f32.mrf.mxu0
      %v1715 = vadd.f32 0.0, %v1714
      %1716 = vmatmul.bf16.gmra.mxu0 %v1636
      %v1717 = vpop.f32.mrf.mxu0
      %v1718 = vadd.f32 0.0, %v1717
      %v1719 = vpop.f32.mrf.mxu0
      %v1720 = vadd.f32 0.0, %v1719
      %1721 = vmatmul.bf16.gmra.mxu0 %v1639
      %v1722 = vpop.f32.mrf.mxu0
      %v1723 = vadd.f32 0.0, %v1722
      %v1724 = vpop.f32.mrf.mxu0
      %v1725 = vadd.f32 0.0, %v1724
      %1726 = vmatmul.bf16.gmra.mxu0 %v1642
      %v1727 = vpop.f32.mrf.mxu0
      %v1728 = vadd.f32 0.0, %v1727
      %v1729 = vpop.f32.mrf.mxu0
      %v1730 = vadd.f32 0.0, %v1729
      %1731 = vmatmul.bf16.gmra.mxu0 %v1645
      %v1732 = vpop.f32.mrf.mxu0
      %v1733 = vadd.f32 0.0, %v1732
      %v1734 = vpop.f32.mrf.mxu0
      %v1735 = vadd.f32 0.0, %v1734
      %1736 = vmatmul.bf16.gmra.mxu0 %v1648
      %v1737 = vpop.f32.mrf.mxu0
      %v1738 = vadd.f32 0.0, %v1737
      %v1739 = vpop.f32.mrf.mxu0
      %v1740 = vadd.f32 0.0, %v1739
      %1741 = vdwg.mxu0
      %v1742 = vadd.f32 %v1519, %v1663
      %v1743 = vadd.f32 %v1520, %v1665
      %v1744 = vadd.f32 %v1521, %v1668
      %v1745 = vadd.f32 %v1522, %v1670
      %v1746 = vadd.f32 %v1523, %v1673
      %v1747 = vadd.f32 %v1524, %v1675
      %v1748 = vadd.f32 %v1525, %v1678
      %v1749 = vadd.f32 %v1526, %v1680
      %v1750 = vadd.f32 %v1527, %v1683
      %v1751 = vadd.f32 %v1528, %v1685
      %v1752 = vadd.f32 %v1529, %v1688
      %v1753 = vadd.f32 %v1530, %v1690
      %v1754 = vadd.f32 %v1531, %v1693
      %v1755 = vadd.f32 %v1532, %v1695
      %v1756 = vadd.f32 %v1533, %v1698
      %v1757 = vadd.f32 %v1534, %v1700
      %v1758 = vadd.f32 %v1535, %v1703
      %v1759 = vadd.f32 %v1536, %v1705
      %v1760 = vadd.f32 %v1537, %v1708
      %v1761 = vadd.f32 %v1538, %v1710
      %v1762 = vadd.f32 %v1539, %v1713
      %v1763 = vadd.f32 %v1540, %v1715
      %v1764 = vadd.f32 %v1541, %v1718
      %v1765 = vadd.f32 %v1542, %v1720
      %v1766 = vadd.f32 %v1543, %v1723
      %v1767 = vadd.f32 %v1544, %v1725
      %v1768 = vadd.f32 %v1545, %v1728
      %v1769 = vadd.f32 %v1546, %v1730
      %v1770 = vadd.f32 %v1547, %v1733
      %v1771 = vadd.f32 %v1548, %v1735
      %v1772 = vadd.f32 %v1549, %v1738
      %v1773 = vadd.f32 %v1550, %v1740
      %v1774 = vld [vmem:[%s1551 + $0x1] sm:$0xff]
      %v1775 = vld [vmem:[%s1551 + $0x9] sm:$0xff]
      %v1776 = vld [vmem:[%s1551 + $0x19] sm:$0xff]
      %v1777 = vld [vmem:[%s1551 + $0x21] sm:$0xff]
      %v1778 = vld [vmem:[%s1551 + $0x31] sm:$0xff]
      %v1779 = vld [vmem:[%s1551 + $0x39] sm:$0xff]
      %v1780 = vld [vmem:[%s1551 + $0x49] sm:$0xff]
      %v1781 = vld [vmem:[%s1551 + $0x51] sm:$0xff]
      %v1782 = vld [vmem:[%s1551 + $0x61] sm:$0xff]
      %v1783 = vld [vmem:[%s1551 + $0x69] sm:$0xff]
      %v1784 = vld [vmem:[%s1551 + $0x79] sm:$0xff]
      %v1785 = vld [vmem:[%s1551 + $0x81] sm:$0xff]
      %v1786 = vld [vmem:[%s1551 + $0x91] sm:$0xff]
      %v1787 = vld [vmem:[%s1551 + $0x99] sm:$0xff]
      %v1788 = vld [vmem:[%s1551 + $0xa9] sm:$0xff]
      %v1789 = vld [vmem:[%s1551 + $0xb1] sm:$0xff]
      %v1790 = vld [vmem:[%s1551 + $0xc1] sm:$0xff]
      %v1791 = vld [vmem:[%s1551 + $0xc9] sm:$0xff]
      %v1792 = vld [vmem:[%s1551 + $0xd9] sm:$0xff]
      %v1793 = vld [vmem:[%s1551 + $0xe1] sm:$0xff]
      %v1794 = vld [vmem:[%s1551 + $0xf1] sm:$0xff]
      %v1795 = vld [vmem:[%s1551 + $0xf9] sm:$0xff]
      %v1796 = vld [vmem:[%s1551 + $0x109] sm:$0xff]
      %v1797 = vld [vmem:[%s1551 + $0x111] sm:$0xff]
      %v1798 = vld [vmem:[%s1551 + $0x121] sm:$0xff]
      %v1799 = vld [vmem:[%s1551 + $0x129] sm:$0xff]
      %v1800 = vld [vmem:[%s1551 + $0x139] sm:$0xff]
      %v1801 = vld [vmem:[%s1551 + $0x141] sm:$0xff]
      %v1802 = vld [vmem:[%s1551 + $0x151] sm:$0xff]
      %v1803 = vld [vmem:[%s1551 + $0x159] sm:$0xff]
      %v1804 = vld [vmem:[%s1551 + $0x169] sm:$0xff]
      %v1805 = vld [vmem:[%s1551 + $0x171] sm:$0xff]
      %v1806 = vpack.c.bf16 %v1775, %v1774
      %v1807 = vpack.c.bf16 %v1777, %v1776
      %v1808 = vpack.c.bf16 %v1779, %v1778
      %v1809 = vpack.c.bf16 %v1781, %v1780
      %v1810 = vpack.c.bf16 %v1783, %v1782
      %v1811 = vpack.c.bf16 %v1785, %v1784
      %v1812 = vpack.c.bf16 %v1787, %v1786
      %v1813 = vpack.c.bf16 %v1789, %v1788
      %v1814 = vpack.c.bf16 %v1791, %v1790
      %v1815 = vpack.c.bf16 %v1793, %v1792
      %v1816 = vpack.c.bf16 %v1795, %v1794
      %v1817 = vpack.c.bf16 %v1797, %v1796
      %v1818 = vpack.c.bf16 %v1799, %v1798
      %v1819 = vpack.c.bf16 %v1801, %v1800
      %v1820 = vpack.c.bf16 %v1803, %v1802
      %v1821 = vpack.c.bf16 %v1805, %v1804
      %s1822 = scalar_lea.vmem %s1, 14
      %v1823 = vld [vmem:[%s1822] sm:$0x3]
      %v1825 = vsel %vm380, %v1806, 0
      %v1828 = vsel %vm380, %v1807, 0
      %v1831 = vsel %vm380, %v1808, 0
      %v1834 = vsel %vm380, %v1809, 0
      %v1837 = vsel %vm380, %v1810, 0
      %v1840 = vsel %vm380, %v1811, 0
      %v1843 = vsel %vm380, %v1812, 0
      %v1846 = vsel %vm380, %v1813, 0
      %v1849 = vsel %vm380, %v1814, 0
      %v1852 = vsel %vm380, %v1815, 0
      %v1855 = vsel %vm380, %v1816, 0
      %v1858 = vsel %vm380, %v1817, 0
      %v1861 = vsel %vm380, %v1818, 0
      %v1864 = vsel %vm380, %v1819, 0
      %v1867 = vsel %vm380, %v1820, 0
      %v1870 = vsel %vm380, %v1821, 0
      %v1873 = vsel %vm429, %v1823, 0
      %1875 = vmatpush.bf16.msra.mxu0 0
      %1876 = vmatpush.bf16.msra.mxu0 0
      %1877 = vmatpush.bf16.msra.mxu0 0
      %1878 = vmatpush.bf16.msra.mxu0 0
      %1879 = vmatpush.bf16.msra.mxu0 0
      %1880 = vmatpush.bf16.msra.mxu0 0
      %1881 = vmatpush.bf16.msra.mxu0 0
      %1882 = vmatpush.bf16.msra.mxu0 %v1873
      %1883 = vmatmul.bf16.gmra.mxu0 %v1825
      %v1884 = vpop.f32.mrf.mxu0
      %v1885 = vadd.f32 0.0, %v1884
      %v1886 = vpop.f32.mrf.mxu0
      %v1887 = vadd.f32 0.0, %v1886
      %1888 = vmatmul.bf16.gmra.mxu0 %v1828
      %v1889 = vpop.f32.mrf.mxu0
      %v1890 = vadd.f32 0.0, %v1889
      %v1891 = vpop.f32.mrf.mxu0
      %v1892 = vadd.f32 0.0, %v1891
      %1893 = vmatmul.bf16.gmra.mxu0 %v1831
      %v1894 = vpop.f32.mrf.mxu0
      %v1895 = vadd.f32 0.0, %v1894
      %v1896 = vpop.f32.mrf.mxu0
      %v1897 = vadd.f32 0.0, %v1896
      %1898 = vmatmul.bf16.gmra.mxu0 %v1834
      %v1899 = vpop.f32.mrf.mxu0
      %v1900 = vadd.f32 0.0, %v1899
      %v1901 = vpop.f32.mrf.mxu0
      %v1902 = vadd.f32 0.0, %v1901
      %1903 = vmatmul.bf16.gmra.mxu0 %v1837
      %v1904 = vpop.f32.mrf.mxu0
      %v1905 = vadd.f32 0.0, %v1904
      %v1906 = vpop.f32.mrf.mxu0
      %v1907 = vadd.f32 0.0, %v1906
      %1908 = vmatmul.bf16.gmra.mxu0 %v1840
      %v1909 = vpop.f32.mrf.mxu0
      %v1910 = vadd.f32 0.0, %v1909
      %v1911 = vpop.f32.mrf.mxu0
      %v1912 = vadd.f32 0.0, %v1911
      %1913 = vmatmul.bf16.gmra.mxu0 %v1843
      %v1914 = vpop.f32.mrf.mxu0
      %v1915 = vadd.f32 0.0, %v1914
      %v1916 = vpop.f32.mrf.mxu0
      %v1917 = vadd.f32 0.0, %v1916
      %1918 = vmatmul.bf16.gmra.mxu0 %v1846
      %v1919 = vpop.f32.mrf.mxu0
      %v1920 = vadd.f32 0.0, %v1919
      %v1921 = vpop.f32.mrf.mxu0
      %v1922 = vadd.f32 0.0, %v1921
      %1923 = vmatmul.bf16.gmra.mxu0 %v1849
      %v1924 = vpop.f32.mrf.mxu0
      %v1925 = vadd.f32 0.0, %v1924
      %v1926 = vpop.f32.mrf.mxu0
      %v1927 = vadd.f32 0.0, %v1926
      %1928 = vmatmul.bf16.gmra.mxu0 %v1852
      %v1929 = vpop.f32.mrf.mxu0
      %v1930 = vadd.f32 0.0, %v1929
      %v1931 = vpop.f32.mrf.mxu0
      %v1932 = vadd.f32 0.0, %v1931
      %1933 = vmatmul.bf16.gmra.mxu0 %v1855
      %v1934 = vpop.f32.mrf.mxu0
      %v1935 = vadd.f32 0.0, %v1934
      %v1936 = vpop.f32.mrf.mxu0
      %v1937 = vadd.f32 0.0, %v1936
      %1938 = vmatmul.bf16.gmra.mxu0 %v1858
      %v1939 = vpop.f32.mrf.mxu0
      %v1940 = vadd.f32 0.0, %v1939
      %v1941 = vpop.f32.mrf.mxu0
      %v1942 = vadd.f32 0.0, %v1941
      %1943 = vmatmul.bf16.gmra.mxu0 %v1861
      %v1944 = vpop.f32.mrf.mxu0
      %v1945 = vadd.f32 0.0, %v1944
      %v1946 = vpop.f32.mrf.mxu0
      %v1947 = vadd.f32 0.0, %v1946
      %1948 = vmatmul.bf16.gmra.mxu0 %v1864
      %v1949 = vpop.f32.mrf.mxu0
      %v1950 = vadd.f32 0.0, %v1949
      %v1951 = vpop.f32.mrf.mxu0
      %v1952 = vadd.f32 0.0, %v1951
      %1953 = vmatmul.bf16.gmra.mxu0 %v1867
      %v1954 = vpop.f32.mrf.mxu0
      %v1955 = vadd.f32 0.0, %v1954
      %v1956 = vpop.f32.mrf.mxu0
      %v1957 = vadd.f32 0.0, %v1956
      %1958 = vmatmul.bf16.gmra.mxu0 %v1870
      %v1959 = vpop.f32.mrf.mxu0
      %v1960 = vadd.f32 0.0, %v1959
      %v1961 = vpop.f32.mrf.mxu0
      %v1962 = vadd.f32 0.0, %v1961
      %1963 = vdwg.mxu0
      %v1964 = vadd.f32 %v1742, %v1885
      %v1965 = vadd.f32 %v1743, %v1887
      %v1966 = vadd.f32 %v1744, %v1890
      %v1967 = vadd.f32 %v1745, %v1892
      %v1968 = vadd.f32 %v1746, %v1895
      %v1969 = vadd.f32 %v1747, %v1897
      %v1970 = vadd.f32 %v1748, %v1900
      %v1971 = vadd.f32 %v1749, %v1902
      %v1972 = vadd.f32 %v1750, %v1905
      %v1973 = vadd.f32 %v1751, %v1907
      %v1974 = vadd.f32 %v1752, %v1910
      %v1975 = vadd.f32 %v1753, %v1912
      %v1976 = vadd.f32 %v1754, %v1915
      %v1977 = vadd.f32 %v1755, %v1917
      %v1978 = vadd.f32 %v1756, %v1920
      %v1979 = vadd.f32 %v1757, %v1922
      %v1980 = vadd.f32 %v1758, %v1925
      %v1981 = vadd.f32 %v1759, %v1927
      %v1982 = vadd.f32 %v1760, %v1930
      %v1983 = vadd.f32 %v1761, %v1932
      %v1984 = vadd.f32 %v1762, %v1935
      %v1985 = vadd.f32 %v1763, %v1937
      %v1986 = vadd.f32 %v1764, %v1940
      %v1987 = vadd.f32 %v1765, %v1942
      %v1988 = vadd.f32 %v1766, %v1945
      %v1989 = vadd.f32 %v1767, %v1947
      %v1990 = vadd.f32 %v1768, %v1950
      %v1991 = vadd.f32 %v1769, %v1952
      %v1992 = vadd.f32 %v1770, %v1955
      %v1993 = vadd.f32 %v1771, %v1957
      %v1994 = vadd.f32 %v1772, %v1960
      %v1995 = vadd.f32 %v1773, %v1962
      %v1996 = vld [vmem:[%s1551 + $0x2] sm:$0xff]
      %v1997 = vld [vmem:[%s1551 + $0xa] sm:$0xff]
      %v1998 = vld [vmem:[%s1551 + $0x1a] sm:$0xff]
      %v1999 = vld [vmem:[%s1551 + $0x22] sm:$0xff]
      %v2000 = vld [vmem:[%s1551 + $0x32] sm:$0xff]
      %v2001 = vld [vmem:[%s1551 + $0x3a] sm:$0xff]
      %v2002 = vld [vmem:[%s1551 + $0x4a] sm:$0xff]
      %v2003 = vld [vmem:[%s1551 + $0x52] sm:$0xff]
      %v2004 = vld [vmem:[%s1551 + $0x62] sm:$0xff]
      %v2005 = vld [vmem:[%s1551 + $0x6a] sm:$0xff]
      %v2006 = vld [vmem:[%s1551 + $0x7a] sm:$0xff]
      %v2007 = vld [vmem:[%s1551 + $0x82] sm:$0xff]
      %v2008 = vld [vmem:[%s1551 + $0x92] sm:$0xff]
      %v2009 = vld [vmem:[%s1551 + $0x9a] sm:$0xff]
      %v2010 = vld [vmem:[%s1551 + $0xaa] sm:$0xff]
      %v2011 = vld [vmem:[%s1551 + $0xb2] sm:$0xff]
      %v2012 = vld [vmem:[%s1551 + $0xc2] sm:$0xff]
      %v2013 = vld [vmem:[%s1551 + $0xca] sm:$0xff]
      %v2014 = vld [vmem:[%s1551 + $0xda] sm:$0xff]
      %v2015 = vld [vmem:[%s1551 + $0xe2] sm:$0xff]
      %v2016 = vld [vmem:[%s1551 + $0xf2] sm:$0xff]
      %v2017 = vld [vmem:[%s1551 + $0xfa] sm:$0xff]
      %v2018 = vld [vmem:[%s1551 + $0x10a] sm:$0xff]
      %v2019 = vld [vmem:[%s1551 + $0x112] sm:$0xff]
      %v2020 = vld [vmem:[%s1551 + $0x122] sm:$0xff]
      %v2021 = vld [vmem:[%s1551 + $0x12a] sm:$0xff]
      %v2022 = vld [vmem:[%s1551 + $0x13a] sm:$0xff]
      %v2023 = vld [vmem:[%s1551 + $0x142] sm:$0xff]
      %v2024 = vld [vmem:[%s1551 + $0x152] sm:$0xff]
      %v2025 = vld [vmem:[%s1551 + $0x15a] sm:$0xff]
      %v2026 = vld [vmem:[%s1551 + $0x16a] sm:$0xff]
      %v2027 = vld [vmem:[%s1551 + $0x172] sm:$0xff]
      %v2028 = vpack.c.bf16 %v1997, %v1996
      %v2029 = vpack.c.bf16 %v1999, %v1998
      %v2030 = vpack.c.bf16 %v2001, %v2000
      %v2031 = vpack.c.bf16 %v2003, %v2002
      %v2032 = vpack.c.bf16 %v2005, %v2004
      %v2033 = vpack.c.bf16 %v2007, %v2006
      %v2034 = vpack.c.bf16 %v2009, %v2008
      %v2035 = vpack.c.bf16 %v2011, %v2010
      %v2036 = vpack.c.bf16 %v2013, %v2012
      %v2037 = vpack.c.bf16 %v2015, %v2014
      %v2038 = vpack.c.bf16 %v2017, %v2016
      %v2039 = vpack.c.bf16 %v2019, %v2018
      %v2040 = vpack.c.bf16 %v2021, %v2020
      %v2041 = vpack.c.bf16 %v2023, %v2022
      %v2042 = vpack.c.bf16 %v2025, %v2024
      %v2043 = vpack.c.bf16 %v2027, %v2026
      %s2044 = scalar_lea.vmem %s1, 16
      %v2045 = vld [vmem:[%s2044] sm:$0x3]
      %v2047 = vsel %vm380, %v2028, 0
      %v2050 = vsel %vm380, %v2029, 0
      %v2053 = vsel %vm380, %v2030, 0
      %v2056 = vsel %vm380, %v2031, 0
      %v2059 = vsel %vm380, %v2032, 0
      %v2062 = vsel %vm380, %v2033, 0
      %v2065 = vsel %vm380, %v2034, 0
      %v2068 = vsel %vm380, %v2035, 0
      %v2071 = vsel %vm380, %v2036, 0
      %v2074 = vsel %vm380, %v2037, 0
      %v2077 = vsel %vm380, %v2038, 0
      %v2080 = vsel %vm380, %v2039, 0
      %v2083 = vsel %vm380, %v2040, 0
      %v2086 = vsel %vm380, %v2041, 0
      %v2089 = vsel %vm380, %v2042, 0
      %v2092 = vsel %vm380, %v2043, 0
      %v2095 = vsel %vm429, %v2045, 0
      %2097 = vmatpush.bf16.msra.mxu0 0
      %2098 = vmatpush.bf16.msra.mxu0 0
      %2099 = vmatpush.bf16.msra.mxu0 0
      %2100 = vmatpush.bf16.msra.mxu0 0
      %2101 = vmatpush.bf16.msra.mxu0 0
      %2102 = vmatpush.bf16.msra.mxu0 0
      %2103 = vmatpush.bf16.msra.mxu0 0
      %2104 = vmatpush.bf16.msra.mxu0 %v2095
      %2105 = vmatmul.bf16.gmra.mxu0 %v2047
      %v2106 = vpop.f32.mrf.mxu0
      %v2107 = vadd.f32 0.0, %v2106
      %v2108 = vpop.f32.mrf.mxu0
      %v2109 = vadd.f32 0.0, %v2108
      %2110 = vmatmul.bf16.gmra.mxu0 %v2050
      %v2111 = vpop.f32.mrf.mxu0
      %v2112 = vadd.f32 0.0, %v2111
      %v2113 = vpop.f32.mrf.mxu0
      %v2114 = vadd.f32 0.0, %v2113
      %2115 = vmatmul.bf16.gmra.mxu0 %v2053
      %v2116 = vpop.f32.mrf.mxu0
      %v2117 = vadd.f32 0.0, %v2116
      %v2118 = vpop.f32.mrf.mxu0
      %v2119 = vadd.f32 0.0, %v2118
      %2120 = vmatmul.bf16.gmra.mxu0 %v2056
      %v2121 = vpop.f32.mrf.mxu0
      %v2122 = vadd.f32 0.0, %v2121
      %v2123 = vpop.f32.mrf.mxu0
      %v2124 = vadd.f32 0.0, %v2123
      %2125 = vmatmul.bf16.gmra.mxu0 %v2059
      %v2126 = vpop.f32.mrf.mxu0
      %v2127 = vadd.f32 0.0, %v2126
      %v2128 = vpop.f32.mrf.mxu0
      %v2129 = vadd.f32 0.0, %v2128
      %2130 = vmatmul.bf16.gmra.mxu0 %v2062
      %v2131 = vpop.f32.mrf.mxu0
      %v2132 = vadd.f32 0.0, %v2131
      %v2133 = vpop.f32.mrf.mxu0
      %v2134 = vadd.f32 0.0, %v2133
      %2135 = vmatmul.bf16.gmra.mxu0 %v2065
      %v2136 = vpop.f32.mrf.mxu0
      %v2137 = vadd.f32 0.0, %v2136
      %v2138 = vpop.f32.mrf.mxu0
      %v2139 = vadd.f32 0.0, %v2138
      %2140 = vmatmul.bf16.gmra.mxu0 %v2068
      %v2141 = vpop.f32.mrf.mxu0
      %v2142 = vadd.f32 0.0, %v2141
      %v2143 = vpop.f32.mrf.mxu0
      %v2144 = vadd.f32 0.0, %v2143
      %2145 = vmatmul.bf16.gmra.mxu0 %v2071
      %v2146 = vpop.f32.mrf.mxu0
      %v2147 = vadd.f32 0.0, %v2146
      %v2148 = vpop.f32.mrf.mxu0
      %v2149 = vadd.f32 0.0, %v2148
      %2150 = vmatmul.bf16.gmra.mxu0 %v2074
      %v2151 = vpop.f32.mrf.mxu0
      %v2152 = vadd.f32 0.0, %v2151
      %v2153 = vpop.f32.mrf.mxu0
      %v2154 = vadd.f32 0.0, %v2153
      %2155 = vmatmul.bf16.gmra.mxu0 %v2077
      %v2156 = vpop.f32.mrf.mxu0
      %v2157 = vadd.f32 0.0, %v2156
      %v2158 = vpop.f32.mrf.mxu0
      %v2159 = vadd.f32 0.0, %v2158
      %2160 = vmatmul.bf16.gmra.mxu0 %v2080
      %v2161 = vpop.f32.mrf.mxu0
      %v2162 = vadd.f32 0.0, %v2161
      %v2163 = vpop.f32.mrf.mxu0
      %v2164 = vadd.f32 0.0, %v2163
      %2165 = vmatmul.bf16.gmra.mxu0 %v2083
      %v2166 = vpop.f32.mrf.mxu0
      %v2167 = vadd.f32 0.0, %v2166
      %v2168 = vpop.f32.mrf.mxu0
      %v2169 = vadd.f32 0.0, %v2168
      %2170 = vmatmul.bf16.gmra.mxu0 %v2086
      %v2171 = vpop.f32.mrf.mxu0
      %v2172 = vadd.f32 0.0, %v2171
      %v2173 = vpop.f32.mrf.mxu0
      %v2174 = vadd.f32 0.0, %v2173
      %2175 = vmatmul.bf16.gmra.mxu0 %v2089
      %v2176 = vpop.f32.mrf.mxu0
      %v2177 = vadd.f32 0.0, %v2176
      %v2178 = vpop.f32.mrf.mxu0
      %v2179 = vadd.f32 0.0, %v2178
      %2180 = vmatmul.bf16.gmra.mxu0 %v2092
      %v2181 = vpop.f32.mrf.mxu0
      %v2182 = vadd.f32 0.0, %v2181
      %v2183 = vpop.f32.mrf.mxu0
      %v2184 = vadd.f32 0.0, %v2183
      %2185 = vdwg.mxu0
      %v2186 = vadd.f32 %v1964, %v2107
      %v2187 = vadd.f32 %v1965, %v2109
      %v2188 = vadd.f32 %v1966, %v2112
      %v2189 = vadd.f32 %v1967, %v2114
      %v2190 = vadd.f32 %v1968, %v2117
      %v2191 = vadd.f32 %v1969, %v2119
      %v2192 = vadd.f32 %v1970, %v2122
      %v2193 = vadd.f32 %v1971, %v2124
      %v2194 = vadd.f32 %v1972, %v2127
      %v2195 = vadd.f32 %v1973, %v2129
      %v2196 = vadd.f32 %v1974, %v2132
      %v2197 = vadd.f32 %v1975, %v2134
      %v2198 = vadd.f32 %v1976, %v2137
      %v2199 = vadd.f32 %v1977, %v2139
      %v2200 = vadd.f32 %v1978, %v2142
      %v2201 = vadd.f32 %v1979, %v2144
      %v2202 = vadd.f32 %v1980, %v2147
      %v2203 = vadd.f32 %v1981, %v2149
      %v2204 = vadd.f32 %v1982, %v2152
      %v2205 = vadd.f32 %v1983, %v2154
      %v2206 = vadd.f32 %v1984, %v2157
      %v2207 = vadd.f32 %v1985, %v2159
      %v2208 = vadd.f32 %v1986, %v2162
      %v2209 = vadd.f32 %v1987, %v2164
      %v2210 = vadd.f32 %v1988, %v2167
      %v2211 = vadd.f32 %v1989, %v2169
      %v2212 = vadd.f32 %v1990, %v2172
      %v2213 = vadd.f32 %v1991, %v2174
      %v2214 = vadd.f32 %v1992, %v2177
      %v2215 = vadd.f32 %v1993, %v2179
      %v2216 = vadd.f32 %v1994, %v2182
      %v2217 = vadd.f32 %v1995, %v2184
      %v2218 = vld [vmem:[%s2] sm:$0x1]
      %v2220 = vperm.slane %v2218, 0
      %v2222 = vadd.f32 %v2186, %v2220
      %v2223 = vadd.f32 %v2187, %v2220
      %v2224 = vadd.f32 %v2188, %v2220
      %v2225 = vadd.f32 %v2189, %v2220
      %v2226 = vadd.f32 %v2190, %v2220
      %v2227 = vadd.f32 %v2191, %v2220
      %v2228 = vadd.f32 %v2192, %v2220
      %v2229 = vadd.f32 %v2193, %v2220
      %v2230 = vadd.f32 %v2194, %v2220
      %v2231 = vadd.f32 %v2195, %v2220
      %v2232 = vadd.f32 %v2196, %v2220
      %v2233 = vadd.f32 %v2197, %v2220
      %v2234 = vadd.f32 %v2198, %v2220
      %v2235 = vadd.f32 %v2199, %v2220
      %v2236 = vadd.f32 %v2200, %v2220
      %v2237 = vadd.f32 %v2201, %v2220
      %v2238 = vadd.f32 %v2202, %v2220
      %v2239 = vadd.f32 %v2203, %v2220
      %v2240 = vadd.f32 %v2204, %v2220
      %v2241 = vadd.f32 %v2205, %v2220
      %v2242 = vadd.f32 %v2206, %v2220
      %v2243 = vadd.f32 %v2207, %v2220
      %v2244 = vadd.f32 %v2208, %v2220
      %v2245 = vadd.f32 %v2209, %v2220
      %v2246 = vadd.f32 %v2210, %v2220
      %v2247 = vadd.f32 %v2211, %v2220
      %v2248 = vadd.f32 %v2212, %v2220
      %v2249 = vadd.f32 %v2213, %v2220
      %v2250 = vadd.f32 %v2214, %v2220
      %v2251 = vadd.f32 %v2215, %v2220
      %v2252 = vadd.f32 %v2216, %v2220
      %v2253 = vadd.f32 %v2217, %v2220
      %v2254 = vmax.f32 %v2222, 0.0
      %v2255 = vmax.f32 %v2223, 0.0
      %v2256 = vmax.f32 %v2224, 0.0
      %v2257 = vmax.f32 %v2225, 0.0
      %v2258 = vmax.f32 %v2226, 0.0
      %v2259 = vmax.f32 %v2227, 0.0
      %v2260 = vmax.f32 %v2228, 0.0
      %v2261 = vmax.f32 %v2229, 0.0
      %v2262 = vmax.f32 %v2230, 0.0
      %v2263 = vmax.f32 %v2231, 0.0
      %v2264 = vmax.f32 %v2232, 0.0
      %v2265 = vmax.f32 %v2233, 0.0
      %v2266 = vmax.f32 %v2234, 0.0
      %v2267 = vmax.f32 %v2235, 0.0
      %v2268 = vmax.f32 %v2236, 0.0
      %v2269 = vmax.f32 %v2237, 0.0
      %v2270 = vmax.f32 %v2238, 0.0
      %v2271 = vmax.f32 %v2239, 0.0
      %v2272 = vmax.f32 %v2240, 0.0
      %v2273 = vmax.f32 %v2241, 0.0
      %v2274 = vmax.f32 %v2242, 0.0
      %v2275 = vmax.f32 %v2243, 0.0
      %v2276 = vmax.f32 %v2244, 0.0
      %v2277 = vmax.f32 %v2245, 0.0
      %v2278 = vmax.f32 %v2246, 0.0
      %v2279 = vmax.f32 %v2247, 0.0
      %v2280 = vmax.f32 %v2248, 0.0
      %v2281 = vmax.f32 %v2249, 0.0
      %v2282 = vmax.f32 %v2250, 0.0
      %v2283 = vmax.f32 %v2251, 0.0
      %v2284 = vmax.f32 %v2252, 0.0
      %v2285 = vmax.f32 %v2253, 0.0
      %v2286 = vpack.c.bf16 %v2255, %v2254
      %v2287 = vpack.c.bf16 %v2257, %v2256
      %v2288 = vpack.c.bf16 %v2259, %v2258
      %v2289 = vpack.c.bf16 %v2261, %v2260
      %v2290 = vpack.c.bf16 %v2263, %v2262
      %v2291 = vpack.c.bf16 %v2265, %v2264
      %v2292 = vpack.c.bf16 %v2267, %v2266
      %v2293 = vpack.c.bf16 %v2269, %v2268
      %v2294 = vpack.c.bf16 %v2271, %v2270
      %v2295 = vpack.c.bf16 %v2273, %v2272
      %v2296 = vpack.c.bf16 %v2275, %v2274
      %v2297 = vpack.c.bf16 %v2277, %v2276
      %v2298 = vpack.c.bf16 %v2279, %v2278
      %v2299 = vpack.c.bf16 %v2281, %v2280
      %v2300 = vpack.c.bf16 %v2283, %v2282
      %v2301 = vpack.c.bf16 %v2285, %v2284
      %v2302 = vld [vmem:[%s3] sm:$0xf]
      %v2303 = vld [vmem:[%s3 + $0x4] sm:$0xf]
      %v2304 = vld [vmem:[%s3 + $0x8] sm:$0xf]
      %v2305 = vld [vmem:[%s3 + $0xc] sm:$0xf]
      %v2306 = vld [vmem:[%s4] sm:$0x1]
      %v2308 = vperm.slane %v2306, 0
      %v2314 = vunpack.c.l.b16 %v2302
      %v2315 = vunpack.c.l.b16 %v2303
      %v2316 = vunpack.c.l.b16 %v2304
      %v2317 = vunpack.c.l.b16 %v2305
      %v2318 = vpack.c.b16 %v2315, %v2314
      %v2319 = vpack.c.b16 %v2317, %v2316
      %vm2322 = vcmask 261120
      %v2324 = vsel %vm2322, %v2286, 0
      %v2327 = vsel %vm2322, %v2287, 0
      %v2330 = vsel %vm2322, %v2288, 0
      %v2333 = vsel %vm2322, %v2289, 0
      %v2336 = vsel %vm2322, %v2290, 0
      %v2339 = vsel %vm2322, %v2291, 0
      %v2342 = vsel %vm2322, %v2292, 0
      %v2345 = vsel %vm2322, %v2293, 0
      %v2348 = vsel %vm2322, %v2294, 0
      %v2351 = vsel %vm2322, %v2295, 0
      %v2354 = vsel %vm2322, %v2296, 0
      %v2357 = vsel %vm2322, %v2297, 0
      %v2360 = vsel %vm2322, %v2298, 0
      %v2363 = vsel %vm2322, %v2299, 0
      %v2366 = vsel %vm2322, %v2300, 0
      %v2369 = vsel %vm2322, %v2301, 0
      %2371 = vmatpush.bf16.msra.mxu0 0
      %2372 = vmatpush.bf16.msra.mxu0 0
      %2373 = vmatpush.bf16.msra.mxu0 0
      %2374 = vmatpush.bf16.msra.mxu0 0
      %2375 = vmatpush.bf16.msra.mxu0 0
      %2376 = vmatpush.bf16.msra.mxu0 0
      %2377 = vmatpush.bf16.msra.mxu0 %v2319
      %2378 = vmatpush.bf16.msra.mxu0 %v2318
      %2379 = vmatmul.bf16.gmra.mxu0 %v2324
      %v2380 = vpop.f32.mrf.mxu0
      %v2381 = vadd.f32 %v2308, %v2380
      %v2382 = vpop.f32.mrf.mxu0
      %v2383 = vadd.f32 %v2308, %v2382
      %2384 = vmatmul.bf16.gmra.mxu0 %v2327
      %v2385 = vpop.f32.mrf.mxu0
      %v2386 = vadd.f32 %v2308, %v2385
      %v2387 = vpop.f32.mrf.mxu0
      %v2388 = vadd.f32 %v2308, %v2387
      %2389 = vmatmul.bf16.gmra.mxu0 %v2330
      %v2390 = vpop.f32.mrf.mxu0
      %v2391 = vadd.f32 %v2308, %v2390
      %v2392 = vpop.f32.mrf.mxu0
      %v2393 = vadd.f32 %v2308, %v2392
      %2394 = vmatmul.bf16.gmra.mxu0 %v2333
      %v2395 = vpop.f32.mrf.mxu0
      %v2396 = vadd.f32 %v2308, %v2395
      %v2397 = vpop.f32.mrf.mxu0
      %v2398 = vadd.f32 %v2308, %v2397
      %2399 = vmatmul.bf16.gmra.mxu0 %v2336
      %v2400 = vpop.f32.mrf.mxu0
      %v2401 = vadd.f32 %v2308, %v2400
      %v2402 = vpop.f32.mrf.mxu0
      %v2403 = vadd.f32 %v2308, %v2402
      %2404 = vmatmul.bf16.gmra.mxu0 %v2339
      %v2405 = vpop.f32.mrf.mxu0
      %v2406 = vadd.f32 %v2308, %v2405
      %v2407 = vpop.f32.mrf.mxu0
      %v2408 = vadd.f32 %v2308, %v2407
      %2409 = vmatmul.bf16.gmra.mxu0 %v2342
      %v2410 = vpop.f32.mrf.mxu0
      %v2411 = vadd.f32 %v2308, %v2410
      %v2412 = vpop.f32.mrf.mxu0
      %v2413 = vadd.f32 %v2308, %v2412
      %2414 = vmatmul.bf16.gmra.mxu0 %v2345
      %v2415 = vpop.f32.mrf.mxu0
      %v2416 = vadd.f32 %v2308, %v2415
      %v2417 = vpop.f32.mrf.mxu0
      %v2418 = vadd.f32 %v2308, %v2417
      %2419 = vmatmul.bf16.gmra.mxu0 %v2348
      %v2420 = vpop.f32.mrf.mxu0
      %v2421 = vadd.f32 %v2308, %v2420
      %v2422 = vpop.f32.mrf.mxu0
      %v2423 = vadd.f32 %v2308, %v2422
      %2424 = vmatmul.bf16.gmra.mxu0 %v2351
      %v2425 = vpop.f32.mrf.mxu0
      %v2426 = vadd.f32 %v2308, %v2425
      %v2427 = vpop.f32.mrf.mxu0
      %v2428 = vadd.f32 %v2308, %v2427
      %2429 = vmatmul.bf16.gmra.mxu0 %v2354
      %v2430 = vpop.f32.mrf.mxu0
      %v2431 = vadd.f32 %v2308, %v2430
      %v2432 = vpop.f32.mrf.mxu0
      %v2433 = vadd.f32 %v2308, %v2432
      %2434 = vmatmul.bf16.gmra.mxu0 %v2357
      %v2435 = vpop.f32.mrf.mxu0
      %v2436 = vadd.f32 %v2308, %v2435
      %v2437 = vpop.f32.mrf.mxu0
      %v2438 = vadd.f32 %v2308, %v2437
      %2439 = vmatmul.bf16.gmra.mxu0 %v2360
      %v2440 = vpop.f32.mrf.mxu0
      %v2441 = vadd.f32 %v2308, %v2440
      %v2442 = vpop.f32.mrf.mxu0
      %v2443 = vadd.f32 %v2308, %v2442
      %2444 = vmatmul.bf16.gmra.mxu0 %v2363
      %v2445 = vpop.f32.mrf.mxu0
      %v2446 = vadd.f32 %v2308, %v2445
      %v2447 = vpop.f32.mrf.mxu0
      %v2448 = vadd.f32 %v2308, %v2447
      %2449 = vmatmul.bf16.gmra.mxu0 %v2366
      %v2450 = vpop.f32.mrf.mxu0
      %v2451 = vadd.f32 %v2308, %v2450
      %v2452 = vpop.f32.mrf.mxu0
      %v2453 = vadd.f32 %v2308, %v2452
      %2454 = vmatmul.bf16.gmra.mxu0 %v2369
      %v2455 = vpop.f32.mrf.mxu0
      %v2456 = vadd.f32 %v2308, %v2455
      %v2457 = vpop.f32.mrf.mxu0
      %v2458 = vadd.f32 %v2308, %v2457
      %2459 = vdwg.mxu0
      %v2460 = vmax.f32 %v2381, 0.0
      %v2461 = vmax.f32 %v2383, 0.0
      %v2462 = vmax.f32 %v2386, 0.0
      %v2463 = vmax.f32 %v2388, 0.0
      %v2464 = vmax.f32 %v2391, 0.0
      %v2465 = vmax.f32 %v2393, 0.0
      %v2466 = vmax.f32 %v2396, 0.0
      %v2467 = vmax.f32 %v2398, 0.0
      %v2468 = vmax.f32 %v2401, 0.0
      %v2469 = vmax.f32 %v2403, 0.0
      %v2470 = vmax.f32 %v2406, 0.0
      %v2471 = vmax.f32 %v2408, 0.0
      %v2472 = vmax.f32 %v2411, 0.0
      %v2473 = vmax.f32 %v2413, 0.0
      %v2474 = vmax.f32 %v2416, 0.0
      %v2475 = vmax.f32 %v2418, 0.0
      %v2476 = vmax.f32 %v2421, 0.0
      %v2477 = vmax.f32 %v2423, 0.0
      %v2478 = vmax.f32 %v2426, 0.0
      %v2479 = vmax.f32 %v2428, 0.0
      %v2480 = vmax.f32 %v2431, 0.0
      %v2481 = vmax.f32 %v2433, 0.0
      %v2482 = vmax.f32 %v2436, 0.0
      %v2483 = vmax.f32 %v2438, 0.0
      %v2484 = vmax.f32 %v2441, 0.0
      %v2485 = vmax.f32 %v2443, 0.0
      %v2486 = vmax.f32 %v2446, 0.0
      %v2487 = vmax.f32 %v2448, 0.0
      %v2488 = vmax.f32 %v2451, 0.0
      %v2489 = vmax.f32 %v2453, 0.0
      %v2490 = vmax.f32 %v2456, 0.0
      %v2491 = vmax.f32 %v2458, 0.0
      %v2492 = vpack.c.bf16 %v2461, %v2460
      %v2493 = vpack.c.bf16 %v2463, %v2462
      %v2494 = vpack.c.bf16 %v2465, %v2464
      %v2495 = vpack.c.bf16 %v2467, %v2466
      %v2496 = vpack.c.bf16 %v2469, %v2468
      %v2497 = vpack.c.bf16 %v2471, %v2470
      %v2498 = vpack.c.bf16 %v2473, %v2472
      %v2499 = vpack.c.bf16 %v2475, %v2474
      %v2500 = vpack.c.bf16 %v2477, %v2476
      %v2501 = vpack.c.bf16 %v2479, %v2478
      %v2502 = vpack.c.bf16 %v2481, %v2480
      %v2503 = vpack.c.bf16 %v2483, %v2482
      %v2504 = vpack.c.bf16 %v2485, %v2484
      %v2505 = vpack.c.bf16 %v2487, %v2486
      %v2506 = vpack.c.bf16 %v2489, %v2488
      %v2507 = vpack.c.bf16 %v2491, %v2490
      %v2508 = vld [vmem:[%s5] sm:$0xf]
      %v2509 = vld [vmem:[%s5 + $0x4] sm:$0xf]
      %v2510 = vld [vmem:[%s5 + $0x8] sm:$0xf]
      %v2511 = vld [vmem:[%s5 + $0xc] sm:$0xf]
      %v2512 = vld [vmem:[%s5 + $0x10] sm:$0xf]
      %v2513 = vld [vmem:[%s5 + $0x14] sm:$0xf]
      %v2514 = vld [vmem:[%s5 + $0x18] sm:$0xf]
      %v2515 = vld [vmem:[%s5 + $0x1c] sm:$0xf]
      %v2516 = vld [vmem:[%s5 + $0x20] sm:$0xf]
      %v2517 = vld [vmem:[%s5 + $0x24] sm:$0xf]
      %v2518 = vld [vmem:[%s5 + $0x28] sm:$0xf]
      %v2519 = vld [vmem:[%s5 + $0x2c] sm:$0xf]
      %v2520 = vld [vmem:[%s5 + $0x30] sm:$0xf]
      %v2521 = vld [vmem:[%s5 + $0x34] sm:$0xf]
      %v2522 = vld [vmem:[%s5 + $0x38] sm:$0xf]
      %v2523 = vld [vmem:[%s5 + $0x3c] sm:$0xf]
      %v2524 = vld [vmem:[%s6] sm:$0x1]
      %v2526 = vperm.slane %v2524, 0
      %v2544 = vunpack.c.l.b16 %v2508
      %v2545 = vunpack.c.l.b16 %v2509
      %v2546 = vunpack.c.l.b16 %v2510
      %v2547 = vunpack.c.l.b16 %v2511
      %v2548 = vunpack.c.l.b16 %v2512
      %v2549 = vunpack.c.l.b16 %v2513
      %v2550 = vunpack.c.l.b16 %v2514
      %v2551 = vunpack.c.l.b16 %v2515
      %v2552 = vunpack.c.l.b16 %v2516
      %v2553 = vunpack.c.l.b16 %v2517
      %v2554 = vunpack.c.l.b16 %v2518
      %v2555 = vunpack.c.l.b16 %v2519
      %v2556 = vunpack.c.l.b16 %v2520
      %v2557 = vunpack.c.l.b16 %v2521
      %v2558 = vunpack.c.l.b16 %v2522
      %v2559 = vunpack.c.l.b16 %v2523
      %v2560 = vpack.c.b16 %v2545, %v2544
      %v2561 = vpack.c.b16 %v2547, %v2546
      %v2562 = vpack.c.b16 %v2549, %v2548
      %v2563 = vpack.c.b16 %v2551, %v2550
      %v2564 = vpack.c.b16 %v2553, %v2552
      %v2565 = vpack.c.b16 %v2555, %v2554
      %v2566 = vpack.c.b16 %v2557, %v2556
      %v2567 = vpack.c.b16 %v2559, %v2558
      %2576 = vmatpush.bf16.msra.mxu0 %v2567
      %2577 = vmatpush.bf16.msra.mxu0 %v2566
      %2578 = vmatpush.bf16.msra.mxu0 %v2565
      %2579 = vmatpush.bf16.msra.mxu0 %v2564
      %2580 = vmatpush.bf16.msra.mxu0 %v2563
      %2581 = vmatpush.bf16.msra.mxu0 %v2562
      %2582 = vmatpush.bf16.msra.mxu0 %v2561
      %2583 = vmatpush.bf16.msra.mxu0 %v2560
      %2584 = vmatmul.bf16.gmra.mxu0 %v2492
      %v2585 = vpop.f32.mrf.mxu0
      %v2586 = vadd.f32 %v2526, %v2585
      %v2587 = vpop.f32.mrf.mxu0
      %v2588 = vadd.f32 %v2526, %v2587
      %2589 = vmatmul.bf16.gmra.mxu0 %v2493
      %v2590 = vpop.f32.mrf.mxu0
      %v2591 = vadd.f32 %v2526, %v2590
      %v2592 = vpop.f32.mrf.mxu0
      %v2593 = vadd.f32 %v2526, %v2592
      %2594 = vmatmul.bf16.gmra.mxu0 %v2494
      %v2595 = vpop.f32.mrf.mxu0
      %v2596 = vadd.f32 %v2526, %v2595
      %v2597 = vpop.f32.mrf.mxu0
      %v2598 = vadd.f32 %v2526, %v2597
      %2599 = vmatmul.bf16.gmra.mxu0 %v2495
      %v2600 = vpop.f32.mrf.mxu0
      %v2601 = vadd.f32 %v2526, %v2600
      %v2602 = vpop.f32.mrf.mxu0
      %v2603 = vadd.f32 %v2526, %v2602
      %2604 = vmatmul.bf16.gmra.mxu0 %v2496
      %v2605 = vpop.f32.mrf.mxu0
      %v2606 = vadd.f32 %v2526, %v2605
      %v2607 = vpop.f32.mrf.mxu0
      %v2608 = vadd.f32 %v2526, %v2607
      %2609 = vmatmul.bf16.gmra.mxu0 %v2497
      %v2610 = vpop.f32.mrf.mxu0
      %v2611 = vadd.f32 %v2526, %v2610
      %v2612 = vpop.f32.mrf.mxu0
      %v2613 = vadd.f32 %v2526, %v2612
      %2614 = vmatmul.bf16.gmra.mxu0 %v2498
      %v2615 = vpop.f32.mrf.mxu0
      %v2616 = vadd.f32 %v2526, %v2615
      %v2617 = vpop.f32.mrf.mxu0
      %v2618 = vadd.f32 %v2526, %v2617
      %2619 = vmatmul.bf16.gmra.mxu0 %v2499
      %v2620 = vpop.f32.mrf.mxu0
      %v2621 = vadd.f32 %v2526, %v2620
      %v2622 = vpop.f32.mrf.mxu0
      %v2623 = vadd.f32 %v2526, %v2622
      %2624 = vmatmul.bf16.gmra.mxu0 %v2500
      %v2625 = vpop.f32.mrf.mxu0
      %v2626 = vadd.f32 %v2526, %v2625
      %v2627 = vpop.f32.mrf.mxu0
      %v2628 = vadd.f32 %v2526, %v2627
      %2629 = vmatmul.bf16.gmra.mxu0 %v2501
      %v2630 = vpop.f32.mrf.mxu0
      %v2631 = vadd.f32 %v2526, %v2630
      %v2632 = vpop.f32.mrf.mxu0
      %v2633 = vadd.f32 %v2526, %v2632
      %2634 = vmatmul.bf16.gmra.mxu0 %v2502
      %v2635 = vpop.f32.mrf.mxu0
      %v2636 = vadd.f32 %v2526, %v2635
      %v2637 = vpop.f32.mrf.mxu0
      %v2638 = vadd.f32 %v2526, %v2637
      %2639 = vmatmul.bf16.gmra.mxu0 %v2503
      %v2640 = vpop.f32.mrf.mxu0
      %v2641 = vadd.f32 %v2526, %v2640
      %v2642 = vpop.f32.mrf.mxu0
      %v2643 = vadd.f32 %v2526, %v2642
      %2644 = vmatmul.bf16.gmra.mxu0 %v2504
      %v2645 = vpop.f32.mrf.mxu0
      %v2646 = vadd.f32 %v2526, %v2645
      %v2647 = vpop.f32.mrf.mxu0
      %v2648 = vadd.f32 %v2526, %v2647
      %2649 = vmatmul.bf16.gmra.mxu0 %v2505
      %v2650 = vpop.f32.mrf.mxu0
      %v2651 = vadd.f32 %v2526, %v2650
      %v2652 = vpop.f32.mrf.mxu0
      %v2653 = vadd.f32 %v2526, %v2652
      %2654 = vmatmul.bf16.gmra.mxu0 %v2506
      %v2655 = vpop.f32.mrf.mxu0
      %v2656 = vadd.f32 %v2526, %v2655
      %v2657 = vpop.f32.mrf.mxu0
      %v2658 = vadd.f32 %v2526, %v2657
      %2659 = vmatmul.bf16.gmra.mxu0 %v2507
      %v2660 = vpop.f32.mrf.mxu0
      %v2661 = vadd.f32 %v2526, %v2660
      %v2662 = vpop.f32.mrf.mxu0
      %v2663 = vadd.f32 %v2526, %v2662
      %2664 = vdwg.mxu0
      %2665 = vst [vmem:[%s278] sm:$0xff] %v2586
      %2666 = vst [vmem:[%s278 + $0x8] sm:$0xff] %v2588
      %2667 = vst [vmem:[%s278 + $0x10] sm:$0xff] %v2591
      %2668 = vst [vmem:[%s278 + $0x18] sm:$0xff] %v2593
      %2669 = vst [vmem:[%s278 + $0x20] sm:$0xff] %v2596
      %2670 = vst [vmem:[%s278 + $0x28] sm:$0xff] %v2598
      %2671 = vst [vmem:[%s278 + $0x30] sm:$0xff] %v2601
      %2672 = vst [vmem:[%s278 + $0x38] sm:$0xff] %v2603
      %2673 = vst [vmem:[%s278 + $0x40] sm:$0xff] %v2606
      %2674 = vst [vmem:[%s278 + $0x48] sm:$0xff] %v2608
      %2675 = vst [vmem:[%s278 + $0x50] sm:$0xff] %v2611
      %2676 = vst [vmem:[%s278 + $0x58] sm:$0xff] %v2613
      %2677 = vst [vmem:[%s278 + $0x60] sm:$0xff] %v2616
      %2678 = vst [vmem:[%s278 + $0x68] sm:$0xff] %v2618
      %2679 = vst [vmem:[%s278 + $0x70] sm:$0xff] %v2621
      %2680 = vst [vmem:[%s278 + $0x78] sm:$0xff] %v2623
      %2681 = vst [vmem:[%s278 + $0x80] sm:$0xff] %v2626
      %2682 = vst [vmem:[%s278 + $0x88] sm:$0xff] %v2628
      %2683 = vst [vmem:[%s278 + $0x90] sm:$0xff] %v2631
      %2684 = vst [vmem:[%s278 + $0x98] sm:$0xff] %v2633
      %2685 = vst [vmem:[%s278 + $0xa0] sm:$0xff] %v2636
      %2686 = vst [vmem:[%s278 + $0xa8] sm:$0xff] %v2638
      %2687 = vst [vmem:[%s278 + $0xb0] sm:$0xff] %v2641
      %2688 = vst [vmem:[%s278 + $0xb8] sm:$0xff] %v2643
      %2689 = vst [vmem:[%s278 + $0xc0] sm:$0xff] %v2646
      %2690 = vst [vmem:[%s278 + $0xc8] sm:$0xff] %v2648
      %2691 = vst [vmem:[%s278 + $0xd0] sm:$0xff] %v2651
      %2692 = vst [vmem:[%s278 + $0xd8] sm:$0xff] %v2653
      %2693 = vst [vmem:[%s278 + $0xe0] sm:$0xff] %v2656
      %2694 = vst [vmem:[%s278 + $0xe8] sm:$0xff] %v2658
      %2695 = vst [vmem:[%s278 + $0xf0] sm:$0xff] %v2661
      %2696 = vst [vmem:[%s278 + $0xf8] sm:$0xff] %v2663
      %s2697 = smul.u32 32, %s18
      %p2698 = scmp.lt.s32.totalorder %s2697, 63
      %s2699 = scalar_select %p2698, %s2697, 63
      %s2700 = smul.addr %s2699, 8
      %s2701 = scalar_lea.vmem %s7, %s2700
      // Predicated region
      $region49: #{pagenet_forward.1} parent=47 // pred_check
        %p2702 = pneg %p188
      $region50: #{pagenet_forward.1} parent=47 // pred_check_branch
        %2704 = sbr.rel (%p2702) target = $region52
      $region51: #{pagenet_forward.1} parent=47 // pred_region
        %s2705 = smul.u32 32, %s18
      $region52: #{pagenet_forward.1} parent=47 // pred_fallthru
        _
    $region48: #{pagenet_forward.1} parent=5 // pred_fallthru
      _
    %p2706 = scmp.le.s32.totalorder 2, %s13
    // Predicated region
    $region53: #{pagenet_forward.1} parent=5 // pred_check
      %p2707 = pneg %p2706
    $region54: #{pagenet_forward.1} parent=5 // pred_check_branch
      %2709 = sbr.rel (%p2707) target = $region56
    $region55: #{pagenet_forward.1} parent=5 // pred_region
      %s2710 = ssub.s32 %s13, 2
      // Predicated region
      $region57: #{pagenet_forward.1} parent=55 // pred_check
        %p2711 = pneg %p194
      $region58: #{pagenet_forward.1} parent=55 // pred_check_branch
        %2713 = sbr.rel (%p2711) target = $region60
      $region59: #{pagenet_forward.1} parent=55 // pred_region
        %s2714 = smul.u32 32, %s19
        %p2715 = scmp.lt.s32.totalorder %s2714, 63
        %s2716 = scalar_select %p2715, %s2714, 63
        %s2717 = smul.addr %s2716, 8
        %s2718 = scalar_lea.vmem %s7, %s2717
      $region60: #{pagenet_forward.1} parent=55 // pred_fallthru
        _
    $region56: #{pagenet_forward.1} parent=5 // pred_fallthru
      _
  $region6: #{pagenet_forward.1} parent=0 // loop_footer
    %s17 = sadd.s32 1, %s13
  $region7: #{pagenet_forward.1} parent=0 // loop_footer_branch
    %12 = sbr.rel target = $region3
  $region8: #{pagenet_forward.1} parent=0 // loop_exit
    _

</llo_original>
